<compile_context>
chip_gen: v7x
topology: tpu7x:2x2x1
jax: 0.10.0
libtpu: 0.0.40
codegen_flags: <defaults>
</compile_context>

<pallas_src>
import functools

import jax
import jax.numpy as jnp
from jax.experimental import pallas as pl
from jax.experimental.pallas import tpu as pltpu


# ---------------------------------------------------------------------------
# helpers
# ---------------------------------------------------------------------------
def _round_up(x, m):
    return ((x + m - 1) // m) * m


_MAX_TM = 1024  # row-tile cap: amortizes per-grid-step overhead
_MAX_TK = 512   # reduction-tile cap


def _choose_tiling(n):
    """Return (n_pad, tm, tk): n_pad multiple of 128, tm|n_pad, tk|n_pad."""
    n_pad = _round_up(n, 128)

    def largest_tile(cap):
        t = min(cap, n_pad)
        while n_pad % t:
            t -= 128
        return t

    return n_pad, largest_tile(_MAX_TM), largest_tile(_MAX_TK)


# ---------------------------------------------------------------------------
# Pallas kernel: fused source/target SAGEConv layer.
#   grid = (branch, row_tile i, src_tile k)     k = reduction axis (last, "arbitrary")
#   acc[:, :cin_pad]  accumulates  counts_tile @ X_tile  (int8 counts -> bf16 MXU, f32 acc)
#   acc[:, cin_pad:]  holds the self features x_i (sliced from the resident X)
#   finalize:  scale agg by 1/in_degree (exact f32), then
#              out = [mean_agg | x] @ [Wl ; Wr] + b      (single bf16 MXU matmul)
# ---------------------------------------------------------------------------
def _fused_sage_kernel(a_ref, x_ref, inv_ref, w_ref, b_ref, o_ref, acc_ref,
                       *, cin_pad, tm, tk, apply_relu):
    i = pl.program_id(1)
    k = pl.program_id(2)
    nk = pl.num_programs(2)

    # int8 edge counts -> bf16 (VPU cast, slack slot), neighbor tile from resident X
    a_bf16 = a_ref[...].astype(jnp.bfloat16)
    koff = pl.multiple_of(k * tk, tk)
    xk = x_ref[pl.ds(koff, tk), :]
    partial = jnp.dot(a_bf16, xk, preferred_element_type=jnp.float32)

    @pl.when(k == 0)
    def _init():
        ioff = pl.multiple_of(i * tm, tm)
        acc_ref[:, :cin_pad] = partial                                   # no zero+add
        acc_ref[:, cin_pad:] = x_ref[pl.ds(ioff, tm), :].astype(jnp.float32)

    @pl.when(k > 0)
    def _accum():
        acc_ref[:, :cin_pad] = acc_ref[:, :cin_pad] + partial

    @pl.when(k == nk - 1)
    def _finalize():
        # counts -> mean: exact f32 per-row 1/in_degree scaling (0 for isolated /
        # padded rows, matching PyG mean aggregation)
        acc_ref[:, :cin_pad] = acc_ref[:, :cin_pad] * inv_ref[...]
        # fused projection on the native bf16 MXU path: [mean_agg | x] @ [Wl ; Wr] + b
        feat = acc_ref[...].astype(jnp.bfloat16)
        out = jnp.dot(feat, w_ref[...], preferred_element_type=jnp.float32)
        out = out + b_ref[...]
        if apply_relu:
            out = jnp.maximum(out, 0.0)
        o_ref[...] = out.astype(o_ref.dtype)


def _fused_sage_pair(A_stack, X_stack, inv_stack, W_stack, b_stack, *, tm, tk,
                     apply_relu, out_dtype):
    """One DirectedGNN layer: both branches in a single pallas_call.

    A_stack:   [2, Np, Np]        int8  (edge counts)
    X_stack:   [2, Np, Cin_p]     bf16  (resident in VMEM per branch)
    inv_stack: [2, Np, 1]         f32   (1 / in_degree, 0 for isolated/padded rows)
    W_stack:   [2, 2*Cin_p, Cout_p] bf16  ([Wl ; Wr] pre-concatenated)
    b_stack:   [2, 1, Cout_p]     f32   (tiny, kept exact)
    returns    [2, Np, Cout_p]    out_dtype
    """
    _, n_pad, _ = A_stack.shape
    cin_pad = X_stack.shape[-1]
    cout_pad = W_stack.shape[-1]
    grid = (2, n_pad // tm, n_pad // tk)

    kernel = functools.partial(_fused_sage_kernel, cin_pad=cin_pad,
                               tm=tm, tk=tk, apply_relu=apply_relu)

    flops = int(2 * 2 * n_pad * n_pad * cin_pad                 # aggregation matmuls
                + 2 * 2 * n_pad * (2 * cin_pad) * cout_pad)     # fused projections
    bytes_accessed = int(
        A_stack.size * A_stack.dtype.itemsize                   # int8, streamed once
        + X_stack.size * X_stack.dtype.itemsize                 # resident: once/branch
        + inv_stack.size * 4
        + W_stack.size * W_stack.dtype.itemsize
        + b_stack.size * 4
        + 2 * n_pad * cout_pad * jnp.dtype(out_dtype).itemsize)

    return pl.pallas_call(
        kernel,
        out_shape=jax.ShapeDtypeStruct((2, n_pad, cout_pad), out_dtype),
        grid=grid,
        in_specs=[
            # int8 edge-count tile [tm, tk]
            pl.BlockSpec((None, tm, tk), lambda br, i, k: (br, i, k)),
            # features: full column, block index only changes with the branch ->
            # fetched once per branch and kept resident in VMEM
            pl.BlockSpec((None, n_pad, cin_pad), lambda br, i, k: (br, 0, 0)),
            # per-row 1/in_degree for the output row tile
            pl.BlockSpec((None, tm, 1), lambda br, i, k: (br, i, 0)),
            # stacked weights [Wl ; Wr] (bf16)
            pl.BlockSpec((None, 2 * cin_pad, cout_pad), lambda br, i, k: (br, 0, 0)),
            # bias (f32, tiny)
            pl.BlockSpec((None, 1, cout_pad), lambda br, i, k: (br, 0, 0)),
        ],
        out_specs=pl.BlockSpec((None, tm, cout_pad), lambda br, i, k: (br, i, 0)),
        scratch_shapes=[pltpu.VMEM((tm, 2 * cin_pad), jnp.float32)],
        compiler_params=pltpu.CompilerParams(
            dimension_semantics=("parallel", "parallel", "arbitrary"),
            vmem_limit_bytes=48 * 1024 * 1024),
        cost_estimate=pl.CostEstimate(
            flops=flops, transcendentals=0, bytes_accessed=bytes_accessed),
    )(A_stack, X_stack, inv_stack, W_stack, b_stack)


# ---------------------------------------------------------------------------
# Glue (plain JAX): dense int8 edge-count adjacency + f32 inverse in-degree,
# built directly at padded shape in the streaming dtype (no f32 O(N^2) temps).
# counts[i, j] = #edges j->i ; inv_deg[i] = 1/in_degree(i) (0 if isolated/padded).
# ---------------------------------------------------------------------------
def _build_count_adj(edge_index, n_pad):
    src, dst = edge_index[0], edge_index[1]
    counts = jnp.zeros((n_pad, n_pad), jnp.int32).at[dst, src].add(1)
    deg = jnp.zeros((n_pad,), jnp.int32).at[dst].add(1)
    inv = jnp.where(deg > 0, 1.0 / jnp.maximum(deg, 1).astype(jnp.float32), 0.0)
    return counts.astype(jnp.int8), inv.reshape(n_pad, 1)


# ---------------------------------------------------------------------------
# DirectedGNN parameters + forward.
# ---------------------------------------------------------------------------
def init_directed_gnn_params(key, in_channels, hidden_channels, out_channels):
    layers = [in_channels, hidden_channels, out_channels]
    params = {"source": [], "target": []}
    keys = jax.random.split(key, 8)
    k_it = iter(keys)
    for n_in, n_out in zip(layers[:-1], layers[1:]):
        for branch in ("source", "target"):
            wl = jax.random.normal(next(k_it), (n_in, n_out), jnp.float32) * 0.1
            wr = jax.random.normal(next(k_it), (n_in, n_out), jnp.float32) * 0.1
            b = jnp.zeros((n_out,), jnp.float32)
            params[branch].append({"wl": wl, "wr": wr, "b": b})
    return params


def directed_gnn_forward(params, s, t, edge_index):
    N, cin = s.shape
    n_pad, tm, tk = _choose_tiling(N)

    # int8 count adjacencies (forward / flipped) + exact f32 inverse degrees
    A_fwd, inv_fwd = _build_count_adj(edge_index, n_pad)
    A_rev, inv_rev = _build_count_adj(jnp.flip(edge_index, axis=0), n_pad)
    A_stack = jnp.stack([A_fwd, A_rev], axis=0)           # int8 [2, Np, Np]
    inv_stack = jnp.stack([inv_fwd, inv_rev], axis=0)     # f32  [2, Np, 1]

    cin_pad = _round_up(cin, 128)
    s_pad = jnp.pad(s, ((0, n_pad - N), (0, cin_pad - cin))).astype(jnp.bfloat16)
    t_pad = jnp.pad(t, ((0, n_pad - N), (0, cin_pad - cin))).astype(jnp.bfloat16)

    num_layers = len(params["source"])
    for layer_id in range(num_layers):
        ps, pt = params["source"][layer_id], params["target"][layer_id]
        cin_l, cout_l = ps["wl"].shape
        cin_pad_l = _round_up(cin_l, 128)
        cout_pad_l = _round_up(cout_l, 128)

        def pad_w(w):
            return jnp.pad(w, ((0, cin_pad_l - w.shape[0]),
                               (0, cout_pad_l - w.shape[1])))

        def pad_b(b):
            return jnp.pad(b, ((0, cout_pad_l - b.shape[0]),)).reshape(1, cout_pad_l)

        # [Wl ; Wr] pre-concatenated, streamed bf16 -> one native MXU matmul in-kernel
        W_stack = jnp.stack(
            [jnp.concatenate([pad_w(ps["wl"]), pad_w(ps["wr"])], axis=0),
             jnp.concatenate([pad_w(pt["wl"]), pad_w(pt["wr"])], axis=0)],
            axis=0).astype(jnp.bfloat16)
        b_stack = jnp.stack([pad_b(ps["b"]), pad_b(pt["b"])], axis=0).astype(jnp.float32)

        is_last = layer_id == num_layers - 1
        # hidden activations stay bf16 so they stream straight into the next layer
        out_dtype = jnp.float32 if is_last else jnp.bfloat16

        # branch 0 (source conv) consumes t with A_fwd; branch 1 (target conv) consumes
        # s with A_rev — exactly the s_new / t_new pairing of the PyTorch module.
        X_stack = jnp.stack([t_pad, s_pad], axis=0)

        out = _fused_sage_pair(A_stack, X_stack, inv_stack, W_stack, b_stack,
                               tm=tm, tk=tk, apply_relu=not is_last,
                               out_dtype=out_dtype)
        # dropout(p=0.5, training=False) == identity in eval mode
        # NOTE: padded output rows equal relu(bias); harmless since padded A columns
        # and inv_deg entries are zero, so they never feed real rows.
        s_pad, t_pad = out[0], out[1]

    cout_final = params["source"][-1]["wl"].shape[1]
    s_out = s_pad[:N, :cout_final].astype(jnp.float32)
    t_out = t_pad[:N, :cout_final].astype(jnp.float32)
    return s_out, t_out


# ---------------------------------------------------------------------------
# pure-JAX reference (f32, dense) for a sanity check
# ---------------------------------------------------------------------------
def _build_mean_adj_f32(edge_index, num_nodes):
    src, dst = edge_index[0], edge_index[1]
    counts = jnp.zeros((num_nodes, num_nodes), jnp.float32).at[dst, src].add(1.0)
    deg = counts.sum(axis=1, keepdims=True)
    return jnp.where(deg > 0, counts / jnp.maximum(deg, 1.0), 0.0)


def _reference_forward(params, s, t, edge_index):
    N = s.shape[0]
    A_fwd = _build_mean_adj_f32(edge_index, N)
    A_rev = _build_mean_adj_f32(jnp.flip(edge_index, axis=0), N)
    num_layers = len(params["source"])
    for lid in range(num_layers):
        ps, pt = params["source"][lid], params["target"][lid]
        s_new = (A_fwd @ t) @ ps["wl"] + t @ ps["wr"] + ps["b"]
        t_new = (A_rev @ s) @ pt["wl"] + s @ pt["wr"] + pt["b"]
        if lid < num_layers - 1:
            s_new = jnp.maximum(s_new, 0.0)
            t_new = jnp.maximum(t_new, 0.0)
        s, t = s_new, t_new
    return s, t


if __name__ == "__main__":
    in_channels, hidden_channels, out_channels = 4, 32, 8
    num_nodes, num_edges = 16, 32

    key = jax.random.PRNGKey(0)
    k_params, k_s, k_t, k_src, k_dst = jax.random.split(key, 5)

    params = init_directed_gnn_params(k_params, in_channels, hidden_channels, out_channels)
    s = jax.random.normal(k_s, (num_nodes, in_channels), jnp.float32)
    t = jax.random.normal(k_t, (num_nodes, in_channels), jnp.float32)
    edge_index = jnp.stack(
        [
            jax.random.randint(k_src, (num_edges,), 0, num_nodes),
            jax.random.randint(k_dst, (num_edges,), 0, num_nodes),
        ],
        axis=0,
    )  # [2, E], int32

    forward = jax.jit(directed_gnn_forward)
    s_out, t_out = forward(params, s, t, edge_index)
    jax.block_until_ready((s_out, t_out))

    assert s_out.shape == (num_nodes, out_channels)
    assert t_out.shape == (num_nodes, out_channels)

    # sanity check vs. f32 reference (bf16 activations/weights => loose tolerance)
    s_ref, t_ref = _reference_forward(params, s, t, edge_index)
    assert bool(jnp.all(jnp.isfinite(s_out))) and bool(jnp.all(jnp.isfinite(t_out)))
    assert float(jnp.max(jnp.abs(s_out - s_ref))) < 5e-2
    assert float(jnp.max(jnp.abs(t_out - t_ref))) < 5e-2

    print("KERNEL_OK")
</pallas_src>

<mosaic_0001>
module attributes {stable_mosaic.version = 11 : i64} {
  func.func private @main(%arg0: i32) attributes {dimension_semantics = [#tpu.dimension_semantics<core_parallel>], iteration_bounds = array<i64: 2>, tpu.core_type = #tpu.core_type<sc_scalar_subcore>, window_params = []} {
    return
  }
}

module attributes {stable_mosaic.version = 11 : i64} {
  func.func private @main(%arg0: i32) attributes {dimension_semantics = [#tpu.dimension_semantics<core_parallel>], iteration_bounds = array<i64: 2>, tpu.core_type = #tpu.core_type<sc_scalar_subcore>, window_params = []} {
    return
  }
}

module attributes {stable_mosaic.version = 11 : i64} {
  func.func @_fused_sage_kernel(%arg0: i32, %arg1: i32, %arg2: i32, %arg3: memref<1x128x128xi8, #tpu.memory_space<vmem>>, %arg4: memref<1x128x128xbf16, #tpu.memory_space<vmem>>, %arg5: memref<1x128x1xf32, #tpu.memory_space<vmem>>, %arg6: memref<1x256x128xbf16, #tpu.memory_space<vmem>>, %arg7: memref<1x1x128xf32, #tpu.memory_space<vmem>>, %arg8: memref<1x128x128xbf16, #tpu.memory_space<vmem>>, %arg9: memref<128x256xf32, #tpu.memory_space<vmem>>) attributes {dimension_semantics = [#tpu.dimension_semantics<parallel>, #tpu.dimension_semantics<parallel>, #tpu.dimension_semantics<arbitrary>], iteration_bounds = array<i64: 2, 1, 1>, scalar_prefetch = 0 : i64, scratch_operands = 1 : i64, tpu.core_type = #tpu.core_type<tc>, window_params = [{transform_indices = @transform_0, window_bounds = array<i64: 1, 128, 128>}, {transform_indices = @transform_1, window_bounds = array<i64: 1, 128, 128>}, {transform_indices = @transform_2, window_bounds = array<i64: 1, 128, 1>}, {transform_indices = @transform_3, window_bounds = array<i64: 1, 256, 128>}, {transform_indices = @transform_4, window_bounds = array<i64: 1, 1, 128>}, {transform_indices = @transform_5, window_bounds = array<i64: 1, 128, 128>}]} {
    %c0 = arith.constant 0 : index
    %c0_0 = arith.constant 0 : index
    %c0_1 = arith.constant 0 : index
    %0 = vector.load %arg3[%c0, %c0_0, %c0_1] : memref<1x128x128xi8, #tpu.memory_space<vmem>>, vector<1x128x128xi8>
    %1 = vector.shape_cast %0 : vector<1x128x128xi8> to vector<128x128xi8>
    %2 = arith.sitofp %1 : vector<128x128xi8> to vector<128x128xbf16>
    %c128_i32 = arith.constant 128 : i32
    %3 = arith.muli %arg2, %c128_i32 : i32
    %4 = tpu.assume_multiple %3, 128 : i32
    %c0_2 = arith.constant 0 : index
    %5 = arith.index_cast %4 : i32 to index
    %c0_3 = arith.constant 0 : index
    %6 = vector.load %arg4[%c0_2, %5, %c0_3] : memref<1x128x128xbf16, #tpu.memory_space<vmem>>, vector<1x128x128xbf16>
    %7 = vector.shape_cast %6 : vector<1x128x128xbf16> to vector<128x128xbf16>
    %cst = arith.constant dense<0.000000e+00> : vector<128x128xf32>
    %8 = tpu.matmul %2, %7, %cst {dimension_numbers = #tpu.dot_dimension_numbers<[1], [0], [0], [1], [0, 0, 1, 1], [], []>} : vector<128x128xbf16>, vector<128x128xbf16>, vector<128x128xf32> -> vector<128x128xf32>
    %c0_i32 = arith.constant 0 : i32
    %9 = arith.cmpi eq, %arg2, %c0_i32 : i32
    %10 = arith.extui %9 : i1 to i32
    %c0_i32_4 = arith.constant 0 : i32
    %11 = arith.cmpi ne, %10, %c0_i32_4 : i32
    scf.if %11 {
      %c128_i32_9 = arith.constant 128 : i32
      %18 = arith.muli %arg1, %c128_i32_9 : i32
      %19 = tpu.assume_multiple %18, 128 : i32
      %c0_10 = arith.constant 0 : index
      %c0_11 = arith.constant 0 : index
      %20 = vector.load %arg9[%c0_10, %c0_11] : memref<128x256xf32, #tpu.memory_space<vmem>>, vector<128x128xf32>
      tpu.vector_store %arg9[%c0_10, %c0_11], %8 {strides = array<i32>} : memref<128x256xf32, #tpu.memory_space<vmem>>, vector<128x128xf32>,
      %c0_12 = arith.constant 0 : index
      %21 = arith.index_cast %19 : i32 to index
      %c0_13 = arith.constant 0 : index
      %22 = vector.load %arg4[%c0_12, %21, %c0_13] : memref<1x128x128xbf16, #tpu.memory_space<vmem>>, vector<1x128x128xbf16>
      %23 = vector.shape_cast %22 : vector<1x128x128xbf16> to vector<128x128xbf16>
      %24 = arith.extf %23 : vector<128x128xbf16> to vector<128x128xf32>
      %c0_14 = arith.constant 0 : index
      %c128 = arith.constant 128 : index
      %25 = vector.load %arg9[%c0_14, %c128] : memref<128x256xf32, #tpu.memory_space<vmem>>, vector<128x128xf32>
      tpu.vector_store %arg9[%c0_14, %c128], %24 {strides = array<i32>} : memref<128x256xf32, #tpu.memory_space<vmem>>, vector<128x128xf32>,
    } else {
    }
    %c0_i32_5 = arith.constant 0 : i32
    %12 = arith.cmpi sgt, %arg2, %c0_i32_5 : i32
    %13 = arith.extui %12 : i1 to i32
    %c0_i32_6 = arith.constant 0 : i32
    %14 = arith.cmpi ne, %13, %c0_i32_6 : i32
    scf.if %14 {
      %c0_9 = arith.constant 0 : index
      %c0_10 = arith.constant 0 : index
      %18 = vector.load %arg9[%c0_9, %c0_10] : memref<128x256xf32, #tpu.memory_space<vmem>>, vector<128x128xf32>
      %19 = arith.addf %18, %8 : vector<128x128xf32>
      %c0_11 = arith.constant 0 : index
      %c0_12 = arith.constant 0 : index
      %20 = vector.load %arg9[%c0_11, %c0_12] : memref<128x256xf32, #tpu.memory_space<vmem>>, vector<128x128xf32>
      tpu.vector_store %arg9[%c0_11, %c0_12], %19 {strides = array<i32>} : memref<128x256xf32, #tpu.memory_space<vmem>>, vector<128x128xf32>,
    } else {
    }
    %c0_i32_7 = arith.constant 0 : i32
    %15 = arith.cmpi eq, %arg2, %c0_i32_7 : i32
    %16 = arith.extui %15 : i1 to i32
    %c0_i32_8 = arith.constant 0 : i32
    %17 = arith.cmpi ne, %16, %c0_i32_8 : i32
    scf.if %17 {
      %c0_9 = arith.constant 0 : index
      %c0_10 = arith.constant 0 : index
      %18 = vector.load %arg9[%c0_9, %c0_10] : memref<128x256xf32, #tpu.memory_space<vmem>>, vector<128x128xf32>
      %c0_11 = arith.constant 0 : index
      %c0_12 = arith.constant 0 : index
      %c0_13 = arith.constant 0 : index
      %19 = vector.load %arg5[%c0_11, %c0_12, %c0_13] : memref<1x128x1xf32, #tpu.memory_space<vmem>>, vector<1x128x1xf32>
      %20 = vector.shape_cast %19 : vector<1x128x1xf32> to vector<128x1xf32>
      %21 = vector.broadcast %20 : vector<128x1xf32> to vector<128x128xf32>
      %22 = arith.mulf %18, %21 : vector<128x128xf32>
      %c0_14 = arith.constant 0 : index
      %c0_15 = arith.constant 0 : index
      %23 = vector.load %arg9[%c0_14, %c0_15] : memref<128x256xf32, #tpu.memory_space<vmem>>, vector<128x128xf32>
      tpu.vector_store %arg9[%c0_14, %c0_15], %22 {strides = array<i32>} : memref<128x256xf32, #tpu.memory_space<vmem>>, vector<128x128xf32>,
      %c0_16 = arith.constant 0 : index
      %c0_17 = arith.constant 0 : index
      %24 = vector.load %arg9[%c0_16, %c0_17] : memref<128x256xf32, #tpu.memory_space<vmem>>, vector<128x256xf32>
      %25 = arith.truncf %24 : vector<128x256xf32> to vector<128x256xbf16>
      %c0_18 = arith.constant 0 : index
      %c0_19 = arith.constant 0 : index
      %c0_20 = arith.constant 0 : index
      %26 = vector.load %arg6[%c0_18, %c0_19, %c0_20] : memref<1x256x128xbf16, #tpu.memory_space<vmem>>, vector<1x256x128xbf16>
      %27 = vector.shape_cast %26 : vector<1x256x128xbf16> to vector<256x128xbf16>
      %cst_21 = arith.constant dense<0.000000e+00> : vector<128x128xf32>
      %28 = tpu.matmul %25, %27, %cst_21 {dimension_numbers = #tpu.dot_dimension_numbers<[1], [0], [0], [1], [0, 0, 1, 1], [], []>} : vector<128x256xbf16>, vector<256x128xbf16>, vector<128x128xf32> -> vector<128x128xf32>
      %c0_22 = arith.constant 0 : index
      %c0_23 = arith.constant 0 : index
      %c0_24 = arith.constant 0 : index
      %29 = vector.load %arg7[%c0_22, %c0_23, %c0_24] : memref<1x1x128xf32, #tpu.memory_space<vmem>>, vector<1x1x128xf32>
      %30 = vector.shape_cast %29 : vector<1x1x128xf32> to vector<1x128xf32>
      %31 = vector.broadcast %30 : vector<1x128xf32> to vector<128x128xf32>
      %32 = arith.addf %28, %31 : vector<128x128xf32>
      %cst_25 = arith.constant 0.000000e+00 : f32
      %33 = vector.broadcast %cst_25 : f32 to vector<128x128xf32>
      %34 = arith.maximumf %32, %33 : vector<128x128xf32>
      %35 = arith.truncf %34 : vector<128x128xf32> to vector<128x128xbf16>
      %c0_26 = arith.constant 0 : index
      %c0_27 = arith.constant 0 : index
      %c0_28 = arith.constant 0 : index
      %36 = vector.load %arg8[%c0_26, %c0_27, %c0_28] : memref<1x128x128xbf16, #tpu.memory_space<vmem>>, vector<1x128x128xbf16>
      %37 = vector.shape_cast %36 : vector<1x128x128xbf16> to vector<128x128xbf16>
      %38 = vector.shape_cast %35 : vector<128x128xbf16> to vector<1x128x128xbf16>
      tpu.vector_store %arg8[%c0_26, %c0_27, %c0_28], %38 {strides = array<i32>} : memref<1x128x128xbf16, #tpu.memory_space<vmem>>, vector<1x128x128xbf16>,
    } else {
    }
    return
  }
  func.func @transform_0(%arg0: i32, %arg1: i32, %arg2: i32) -> (i32, i32, i32) {
    %c0_i32 = arith.constant 0 : i32
    return %arg0, %arg1, %arg2 : i32, i32, i32
  }
  func.func @transform_1(%arg0: i32, %arg1: i32, %arg2: i32) -> (i32, i32, i32) {
    %c0_i32 = arith.constant 0 : i32
    %c0_i32_0 = arith.constant 0 : i32
    %c0_i32_1 = arith.constant 0 : i32
    return %arg0, %c0_i32, %c0_i32_0 : i32, i32, i32
  }
  func.func @transform_2(%arg0: i32, %arg1: i32, %arg2: i32) -> (i32, i32, i32) {
    %c0_i32 = arith.constant 0 : i32
    %c0_i32_0 = arith.constant 0 : i32
    return %arg0, %arg1, %c0_i32 : i32, i32, i32
  }
  func.func @transform_3(%arg0: i32, %arg1: i32, %arg2: i32) -> (i32, i32, i32) {
    %c0_i32 = arith.constant 0 : i32
    %c0_i32_0 = arith.constant 0 : i32
    %c0_i32_1 = arith.constant 0 : i32
    return %arg0, %c0_i32, %c0_i32_0 : i32, i32, i32
  }
  func.func @transform_4(%arg0: i32, %arg1: i32, %arg2: i32) -> (i32, i32, i32) {
    %c0_i32 = arith.constant 0 : i32
    %c0_i32_0 = arith.constant 0 : i32
    %c0_i32_1 = arith.constant 0 : i32
    return %arg0, %c0_i32, %c0_i32_0 : i32, i32, i32
  }
  func.func @transform_5(%arg0: i32, %arg1: i32, %arg2: i32) -> (i32, i32, i32) {
    %c0_i32 = arith.constant 0 : i32
    %c0_i32_0 = arith.constant 0 : i32
    return %arg0, %arg1, %c0_i32 : i32, i32, i32
  }
}

module attributes {stable_mosaic.version = 11 : i64} {
  func.func @_fused_sage_kernel(%arg0: i32, %arg1: i32, %arg2: i32, %arg3: memref<1x128x128xi8, #tpu.memory_space<vmem>>, %arg4: memref<1x128x128xbf16, #tpu.memory_space<vmem>>, %arg5: memref<1x128x1xf32, #tpu.memory_space<vmem>>, %arg6: memref<1x256x128xbf16, #tpu.memory_space<vmem>>, %arg7: memref<1x1x128xf32, #tpu.memory_space<vmem>>, %arg8: memref<1x128x128xf32, #tpu.memory_space<vmem>>, %arg9: memref<128x256xf32, #tpu.memory_space<vmem>>) attributes {dimension_semantics = [#tpu.dimension_semantics<parallel>, #tpu.dimension_semantics<parallel>, #tpu.dimension_semantics<arbitrary>], iteration_bounds = array<i64: 2, 1, 1>, scalar_prefetch = 0 : i64, scratch_operands = 1 : i64, tpu.core_type = #tpu.core_type<tc>, window_params = [{transform_indices = @transform_0, window_bounds = array<i64: 1, 128, 128>}, {transform_indices = @transform_1, window_bounds = array<i64: 1, 128, 128>}, {transform_indices = @transform_2, window_bounds = array<i64: 1, 128, 1>}, {transform_indices = @transform_3, window_bounds = array<i64: 1, 256, 128>}, {transform_indices = @transform_4, window_bounds = array<i64: 1, 1, 128>}, {transform_indices = @transform_5, window_bounds = array<i64: 1, 128, 128>}]} {
    %c0 = arith.constant 0 : index
    %c0_0 = arith.constant 0 : index
    %c0_1 = arith.constant 0 : index
    %0 = vector.load %arg3[%c0, %c0_0, %c0_1] : memref<1x128x128xi8, #tpu.memory_space<vmem>>, vector<1x128x128xi8>
    %1 = vector.shape_cast %0 : vector<1x128x128xi8> to vector<128x128xi8>
    %2 = arith.sitofp %1 : vector<128x128xi8> to vector<128x128xbf16>
    %c128_i32 = arith.constant 128 : i32
    %3 = arith.muli %arg2, %c128_i32 : i32
    %4 = tpu.assume_multiple %3, 128 : i32
    %c0_2 = arith.constant 0 : index
    %5 = arith.index_cast %4 : i32 to index
    %c0_3 = arith.constant 0 : index
    %6 = vector.load %arg4[%c0_2, %5, %c0_3] : memref<1x128x128xbf16, #tpu.memory_space<vmem>>, vector<1x128x128xbf16>
    %7 = vector.shape_cast %6 : vector<1x128x128xbf16> to vector<128x128xbf16>
    %cst = arith.constant dense<0.000000e+00> : vector<128x128xf32>
    %8 = tpu.matmul %2, %7, %cst {dimension_numbers = #tpu.dot_dimension_numbers<[1], [0], [0], [1], [0, 0, 1, 1], [], []>} : vector<128x128xbf16>, vector<128x128xbf16>, vector<128x128xf32> -> vector<128x128xf32>
    %c0_i32 = arith.constant 0 : i32
    %9 = arith.cmpi eq, %arg2, %c0_i32 : i32
    %10 = arith.extui %9 : i1 to i32
    %c0_i32_4 = arith.constant 0 : i32
    %11 = arith.cmpi ne, %10, %c0_i32_4 : i32
    scf.if %11 {
      %c128_i32_9 = arith.constant 128 : i32
      %18 = arith.muli %arg1, %c128_i32_9 : i32
      %19 = tpu.assume_multiple %18, 128 : i32
      %c0_10 = arith.constant 0 : index
      %c0_11 = arith.constant 0 : index
      %20 = vector.load %arg9[%c0_10, %c0_11] : memref<128x256xf32, #tpu.memory_space<vmem>>, vector<128x128xf32>
      tpu.vector_store %arg9[%c0_10, %c0_11], %8 {strides = array<i32>} : memref<128x256xf32, #tpu.memory_space<vmem>>, vector<128x128xf32>,
      %c0_12 = arith.constant 0 : index
      %21 = arith.index_cast %19 : i32 to index
      %c0_13 = arith.constant 0 : index
      %22 = vector.load %arg4[%c0_12, %21, %c0_13] : memref<1x128x128xbf16, #tpu.memory_space<vmem>>, vector<1x128x128xbf16>
      %23 = vector.shape_cast %22 : vector<1x128x128xbf16> to vector<128x128xbf16>
      %24 = arith.extf %23 : vector<128x128xbf16> to vector<128x128xf32>
      %c0_14 = arith.constant 0 : index
      %c128 = arith.constant 128 : index
      %25 = vector.load %arg9[%c0_14, %c128] : memref<128x256xf32, #tpu.memory_space<vmem>>, vector<128x128xf32>
      tpu.vector_store %arg9[%c0_14, %c128], %24 {strides = array<i32>} : memref<128x256xf32, #tpu.memory_space<vmem>>, vector<128x128xf32>,
    } else {
    }
    %c0_i32_5 = arith.constant 0 : i32
    %12 = arith.cmpi sgt, %arg2, %c0_i32_5 : i32
    %13 = arith.extui %12 : i1 to i32
    %c0_i32_6 = arith.constant 0 : i32
    %14 = arith.cmpi ne, %13, %c0_i32_6 : i32
    scf.if %14 {
      %c0_9 = arith.constant 0 : index
      %c0_10 = arith.constant 0 : index
      %18 = vector.load %arg9[%c0_9, %c0_10] : memref<128x256xf32, #tpu.memory_space<vmem>>, vector<128x128xf32>
      %19 = arith.addf %18, %8 : vector<128x128xf32>
      %c0_11 = arith.constant 0 : index
      %c0_12 = arith.constant 0 : index
      %20 = vector.load %arg9[%c0_11, %c0_12] : memref<128x256xf32, #tpu.memory_space<vmem>>, vector<128x128xf32>
      tpu.vector_store %arg9[%c0_11, %c0_12], %19 {strides = array<i32>} : memref<128x256xf32, #tpu.memory_space<vmem>>, vector<128x128xf32>,
    } else {
    }
    %c0_i32_7 = arith.constant 0 : i32
    %15 = arith.cmpi eq, %arg2, %c0_i32_7 : i32
    %16 = arith.extui %15 : i1 to i32
    %c0_i32_8 = arith.constant 0 : i32
    %17 = arith.cmpi ne, %16, %c0_i32_8 : i32
    scf.if %17 {
      %c0_9 = arith.constant 0 : index
      %c0_10 = arith.constant 0 : index
      %18 = vector.load %arg9[%c0_9, %c0_10] : memref<128x256xf32, #tpu.memory_space<vmem>>, vector<128x128xf32>
      %c0_11 = arith.constant 0 : index
      %c0_12 = arith.constant 0 : index
      %c0_13 = arith.constant 0 : index
      %19 = vector.load %arg5[%c0_11, %c0_12, %c0_13] : memref<1x128x1xf32, #tpu.memory_space<vmem>>, vector<1x128x1xf32>
      %20 = vector.shape_cast %19 : vector<1x128x1xf32> to vector<128x1xf32>
      %21 = vector.broadcast %20 : vector<128x1xf32> to vector<128x128xf32>
      %22 = arith.mulf %18, %21 : vector<128x128xf32>
      %c0_14 = arith.constant 0 : index
      %c0_15 = arith.constant 0 : index
      %23 = vector.load %arg9[%c0_14, %c0_15] : memref<128x256xf32, #tpu.memory_space<vmem>>, vector<128x128xf32>
      tpu.vector_store %arg9[%c0_14, %c0_15], %22 {strides = array<i32>} : memref<128x256xf32, #tpu.memory_space<vmem>>, vector<128x128xf32>,
      %c0_16 = arith.constant 0 : index
      %c0_17 = arith.constant 0 : index
      %24 = vector.load %arg9[%c0_16, %c0_17] : memref<128x256xf32, #tpu.memory_space<vmem>>, vector<128x256xf32>
      %25 = arith.truncf %24 : vector<128x256xf32> to vector<128x256xbf16>
      %c0_18 = arith.constant 0 : index
      %c0_19 = arith.constant 0 : index
      %c0_20 = arith.constant 0 : index
      %26 = vector.load %arg6[%c0_18, %c0_19, %c0_20] : memref<1x256x128xbf16, #tpu.memory_space<vmem>>, vector<1x256x128xbf16>
      %27 = vector.shape_cast %26 : vector<1x256x128xbf16> to vector<256x128xbf16>
      %cst_21 = arith.constant dense<0.000000e+00> : vector<128x128xf32>
      %28 = tpu.matmul %25, %27, %cst_21 {dimension_numbers = #tpu.dot_dimension_numbers<[1], [0], [0], [1], [0, 0, 1, 1], [], []>} : vector<128x256xbf16>, vector<256x128xbf16>, vector<128x128xf32> -> vector<128x128xf32>
      %c0_22 = arith.constant 0 : index
      %c0_23 = arith.constant 0 : index
      %c0_24 = arith.constant 0 : index
      %29 = vector.load %arg7[%c0_22, %c0_23, %c0_24] : memref<1x1x128xf32, #tpu.memory_space<vmem>>, vector<1x1x128xf32>
      %30 = vector.shape_cast %29 : vector<1x1x128xf32> to vector<1x128xf32>
      %31 = vector.broadcast %30 : vector<1x128xf32> to vector<128x128xf32>
      %32 = arith.addf %28, %31 : vector<128x128xf32>
      %c0_25 = arith.constant 0 : index
      %c0_26 = arith.constant 0 : index
      %c0_27 = arith.constant 0 : index
      %33 = vector.load %arg8[%c0_25, %c0_26, %c0_27] : memref<1x128x128xf32, #tpu.memory_space<vmem>>, vector<1x128x128xf32>
      %34 = vector.shape_cast %33 : vector<1x128x128xf32> to vector<128x128xf32>
      %35 = vector.shape_cast %32 : vector<128x128xf32> to vector<1x128x128xf32>
      tpu.vector_store %arg8[%c0_25, %c0_26, %c0_27], %35 {strides = array<i32>} : memref<1x128x128xf32, #tpu.memory_space<vmem>>, vector<1x128x128xf32>,
    } else {
    }
    return
  }
  func.func @transform_0(%arg0: i32, %arg1: i32, %arg2: i32) -> (i32, i32, i32) {
    %c0_i32 = arith.constant 0 : i32
    return %arg0, %arg1, %arg2 : i32, i32, i32
  }
  func.func @transform_1(%arg0: i32, %arg1: i32, %arg2: i32) -> (i32, i32, i32) {
    %c0_i32 = arith.constant 0 : i32
    %c0_i32_0 = arith.constant 0 : i32
    %c0_i32_1 = arith.constant 0 : i32
    return %arg0, %c0_i32, %c0_i32_0 : i32, i32, i32
  }
  func.func @transform_2(%arg0: i32, %arg1: i32, %arg2: i32) -> (i32, i32, i32) {
    %c0_i32 = arith.constant 0 : i32
    %c0_i32_0 = arith.constant 0 : i32
    return %arg0, %arg1, %c0_i32 : i32, i32, i32
  }
  func.func @transform_3(%arg0: i32, %arg1: i32, %arg2: i32) -> (i32, i32, i32) {
    %c0_i32 = arith.constant 0 : i32
    %c0_i32_0 = arith.constant 0 : i32
    %c0_i32_1 = arith.constant 0 : i32
    return %arg0, %c0_i32, %c0_i32_0 : i32, i32, i32
  }
  func.func @transform_4(%arg0: i32, %arg1: i32, %arg2: i32) -> (i32, i32, i32) {
    %c0_i32 = arith.constant 0 : i32
    %c0_i32_0 = arith.constant 0 : i32
    %c0_i32_1 = arith.constant 0 : i32
    return %arg0, %c0_i32, %c0_i32_0 : i32, i32, i32
  }
  func.func @transform_5(%arg0: i32, %arg1: i32, %arg2: i32) -> (i32, i32, i32) {
    %c0_i32 = arith.constant 0 : i32
    %c0_i32_0 = arith.constant 0 : i32
    return %arg0, %arg1, %c0_i32 : i32, i32, i32
  }
}

</mosaic_0001>

<llo_original>
// kernel: directed_gnn_forward.3
$region0: #{directed_gnn_forward.3}
  #allocation0 [shape = 'u32[]', space=smem, size = 0x4, offset = 0x4, fixed_abs, tag = 'smem constant byte address 0x4 - core index']
  #allocation1 [shape = 'u32[144,128]{1,0:T(1,128)}', space=vmem, size = 0x12000, scoped, tag = 'internal scratch']
  #allocation2 [shape = 'f32[128,256]{1,0:T(8,128)}', space=vmem, size = 0x20000, scoped, tag = 'scratch operand']
  %s0 = inlined_call_operand.vmem [shape: s8[2,128,128], index: 0, kind: input, shape index: {}]
  %s1 = inlined_call_operand.vmem [shape: bf16[2,128,128], index: 1, kind: input, shape index: {}]
  %s2 = inlined_call_operand.vmem [shape: f32[2,128,1], index: 2, kind: input, shape index: {}]
  %s3 = inlined_call_operand.vmem [shape: bf16[2,256,128], index: 3, kind: input, shape index: {}]
  %s4 = inlined_call_operand.vmem [shape: f32[2,1,128], index: 4, kind: input, shape index: {}]
  %s5 = inlined_call_operand.vmem [shape: f32[2,128,128], index: 5, kind: output, shape index: {}]
  %s6 = sld [smem:[#allocation0]]
  $region65: #{directed_gnn_forward.3} parent=0
    _
  %s8 = ssub.s32 1, %s6
  %s9 = scalar_select 0, %s8, %s6
  loop: start=0, step=1, limit=4
  $region2: #{directed_gnn_forward.3} parent=0 // loop_pre_header
    _
  $region3: #{directed_gnn_forward.3} parent=0 // loop_header
    %s11 = sphi 0, %s15
    %p12 = scmp.ge.s32.totalorder %s11, 4
    %s18 = sphi 0, %s37
    %s19 = sphi 0, %s33
    %s20 = sphi 0, %s29
    %s21 = sphi 0, %s18
    %s22 = sphi 0, %s19
    %s23 = sphi 0, %s20
    %s24 = sphi 0, %s21
    %s25 = sphi 0, %s22
    %s26 = sphi 0, %s23
    %s44 = sphi 0, %s46
    %s47 = sphi 0, %s44
    %s48 = sphi 0, %s47
    %s64 = sphi 0, %s48
    %s70 = sphi 0, %s72
    %s73 = sphi 0, %s70
    %s74 = sphi 0, %s73
    %s90 = sphi 0, %s74
    %s98 = sphi 0, %s100
    %s101 = sphi 0, %s98
    %s102 = sphi 0, %s101
    %s118 = sphi 0, %s102
    %s124 = sphi 0, %s126
    %s127 = sphi 0, %s124
    %s128 = sphi 0, %s127
    %s144 = sphi 0, %s128
    %s150 = sphi 0, %s152
    %s153 = sphi 0, %s150
    %s154 = sphi 0, %s153
    %s170 = sphi 0, %s154
    %s178 = sphi 0, %s180
    %s181 = sphi 0, %s178
    %s182 = sphi 0, %s181
    %s198 = sphi 0, %s182
  $region4: #{directed_gnn_forward.3} parent=0 // loop_header_branch
    %14 = sbr.rel (%p12) target = $region8
  $region5: #{directed_gnn_forward.3} parent=0 // loop_body
    %s16 = ssub.s32 %s11, 1
    %s17 = ssub.s32 %s11, 2
    %s27 = sadd.s32 1, %s20
    %p28 = scmp.ge.s32.totalorder %s27, 1
    %s29 = scalar_select %p28, 0, %s27
    %s30 = sadd.s32 1, %s19
    %s31 = scalar_select %p28, %s30, %s19
    %p32 = scmp.ge.s32.totalorder %s31, 1
    %s33 = scalar_select %p32, 0, %s31
    %s34 = sadd.s32 1, %s18
    %s35 = scalar_select %p32, %s34, %s18
    %p36 = scmp.ge.s32.totalorder %s35, 2
    %s37 = scalar_select %p36, 0, %s35
    %s38 = ssub.s32 %s18, %s37
    %s39 = ssub.s32 %s19, %s33
    %s40 = sor.u32 %s38, %s39
    %s41 = ssub.s32 %s20, %s29
    %s42 = sor.u32 %s40, %s41
    %p43 = scmp.eq.s32.totalorder %s42, 0
    %s45 = sadd.s32 %s44, 1
    %s46 = scalar_select %p43, %s44, %s45
    %p49 = pneg %p43
    %p50 = scmp.eq.s32.totalorder %s11, 1
    %p51 = por %p49, %p50
    %p52 = scmp.ne.s32.totalorder %s44, %s47
    %p53 = scmp.eq.s32.totalorder %s11, 0
    %p54 = por %p52, %p53
    %p55 = scmp.ne.s32.totalorder %s44, %s47
    %p56 = scmp.eq.s32.totalorder %s16, 1
    %p57 = por %p55, %p56
    %p58 = scmp.ne.s32.totalorder %s47, %s48
    %p59 = scmp.eq.s32.totalorder %s16, 0
    %p60 = por %p58, %p59
    %p61 = scmp.ne.s32.totalorder %s47, %s48
    %p62 = scmp.eq.s32.totalorder %s17, 1
    %p63 = por %p61, %p62
    %p65 = scmp.ne.s32.totalorder %s48, %s64
    %p66 = scmp.eq.s32.totalorder %s17, 0
    %p67 = por %p65, %p66
    %s68 = ssub.s32 %s18, %s37
    %p69 = scmp.eq.s32.totalorder %s68, 0
    %s71 = sadd.s32 %s70, 1
    %s72 = scalar_select %p69, %s70, %s71
    %p75 = pneg %p69
    %p76 = scmp.eq.s32.totalorder %s11, 1
    %p77 = por %p75, %p76
    %p78 = scmp.ne.s32.totalorder %s70, %s73
    %p79 = scmp.eq.s32.totalorder %s11, 0
    %p80 = por %p78, %p79
    %p81 = scmp.ne.s32.totalorder %s70, %s73
    %p82 = scmp.eq.s32.totalorder %s16, 1
    %p83 = por %p81, %p82
    %p84 = scmp.ne.s32.totalorder %s73, %s74
    %p85 = scmp.eq.s32.totalorder %s16, 0
    %p86 = por %p84, %p85
    %p87 = scmp.ne.s32.totalorder %s73, %s74
    %p88 = scmp.eq.s32.totalorder %s17, 1
    %p89 = por %p87, %p88
    %p91 = scmp.ne.s32.totalorder %s74, %s90
    %p92 = scmp.eq.s32.totalorder %s17, 0
    %p93 = por %p91, %p92
    %s94 = ssub.s32 %s18, %s37
    %s95 = ssub.s32 %s19, %s33
    %s96 = sor.u32 %s94, %s95
    %p97 = scmp.eq.s32.totalorder %s96, 0
    %s99 = sadd.s32 %s98, 1
    %s100 = scalar_select %p97, %s98, %s99
    %p103 = pneg %p97
    %p104 = scmp.eq.s32.totalorder %s11, 1
    %p105 = por %p103, %p104
    %p106 = scmp.ne.s32.totalorder %s98, %s101
    %p107 = scmp.eq.s32.totalorder %s11, 0
    %p108 = por %p106, %p107
    %p109 = scmp.ne.s32.totalorder %s98, %s101
    %p110 = scmp.eq.s32.totalorder %s16, 1
    %p111 = por %p109, %p110
    %p112 = scmp.ne.s32.totalorder %s101, %s102
    %p113 = scmp.eq.s32.totalorder %s16, 0
    %p114 = por %p112, %p113
    %p115 = scmp.ne.s32.totalorder %s101, %s102
    %p116 = scmp.eq.s32.totalorder %s17, 1
    %p117 = por %p115, %p116
    %p119 = scmp.ne.s32.totalorder %s102, %s118
    %p120 = scmp.eq.s32.totalorder %s17, 0
    %p121 = por %p119, %p120
    %s122 = ssub.s32 %s18, %s37
    %p123 = scmp.eq.s32.totalorder %s122, 0
    %s125 = sadd.s32 %s124, 1
    %s126 = scalar_select %p123, %s124, %s125
    %p129 = pneg %p123
    %p130 = scmp.eq.s32.totalorder %s11, 1
    %p131 = por %p129, %p130
    %p132 = scmp.ne.s32.totalorder %s124, %s127
    %p133 = scmp.eq.s32.totalorder %s11, 0
    %p134 = por %p132, %p133
    %p135 = scmp.ne.s32.totalorder %s124, %s127
    %p136 = scmp.eq.s32.totalorder %s16, 1
    %p137 = por %p135, %p136
    %p138 = scmp.ne.s32.totalorder %s127, %s128
    %p139 = scmp.eq.s32.totalorder %s16, 0
    %p140 = por %p138, %p139
    %p141 = scmp.ne.s32.totalorder %s127, %s128
    %p142 = scmp.eq.s32.totalorder %s17, 1
    %p143 = por %p141, %p142
    %p145 = scmp.ne.s32.totalorder %s128, %s144
    %p146 = scmp.eq.s32.totalorder %s17, 0
    %p147 = por %p145, %p146
    %s148 = ssub.s32 %s18, %s37
    %p149 = scmp.eq.s32.totalorder %s148, 0
    %s151 = sadd.s32 %s150, 1
    %s152 = scalar_select %p149, %s150, %s151
    %p155 = pneg %p149
    %p156 = scmp.eq.s32.totalorder %s11, 1
    %p157 = por %p155, %p156
    %p158 = scmp.ne.s32.totalorder %s150, %s153
    %p159 = scmp.eq.s32.totalorder %s11, 0
    %p160 = por %p158, %p159
    %p161 = scmp.ne.s32.totalorder %s150, %s153
    %p162 = scmp.eq.s32.totalorder %s16, 1
    %p163 = por %p161, %p162
    %p164 = scmp.ne.s32.totalorder %s153, %s154
    %p165 = scmp.eq.s32.totalorder %s16, 0
    %p166 = por %p164, %p165
    %p167 = scmp.ne.s32.totalorder %s153, %s154
    %p168 = scmp.eq.s32.totalorder %s17, 1
    %p169 = por %p167, %p168
    %p171 = scmp.ne.s32.totalorder %s154, %s170
    %p172 = scmp.eq.s32.totalorder %s17, 0
    %p173 = por %p171, %p172
    %s174 = ssub.s32 %s18, %s37
    %s175 = ssub.s32 %s19, %s33
    %s176 = sor.u32 %s174, %s175
    %p177 = scmp.eq.s32.totalorder %s176, 0
    %s179 = sadd.s32 %s178, 1
    %s180 = scalar_select %p177, %s178, %s179
    %p183 = pneg %p177
    %p184 = scmp.eq.s32.totalorder %s11, 1
    %p185 = por %p183, %p184
    %p186 = scmp.ne.s32.totalorder %s178, %s181
    %p187 = scmp.eq.s32.totalorder %s11, 0
    %p188 = por %p186, %p187
    %p189 = scmp.ne.s32.totalorder %s178, %s181
    %p190 = scmp.eq.s32.totalorder %s16, 1
    %p191 = por %p189, %p190
    %p192 = scmp.ne.s32.totalorder %s181, %s182
    %p193 = scmp.eq.s32.totalorder %s16, 0
    %p194 = por %p192, %p193
    %p195 = scmp.ne.s32.totalorder %s181, %s182
    %p196 = scmp.eq.s32.totalorder %s17, 1
    %p197 = por %p195, %p196
    %p199 = scmp.ne.s32.totalorder %s182, %s198
    %p200 = scmp.eq.s32.totalorder %s17, 0
    %p201 = por %p199, %p200
    %p202 = scmp.le.s32.totalorder 1, %s11
    %p203 = scmp.lt.s32.totalorder %s11, 3
    %p204 = pnand %p202, %p203
    %p205 = pneg %p204
    // Predicated region
    $region9: #{directed_gnn_forward.3} parent=5 // pred_check
      _
    $region10: #{directed_gnn_forward.3} parent=5 // pred_check_branch
      %207 = sbr.rel (%p204) target = $region12
    $region11: #{directed_gnn_forward.3} parent=5 // pred_region
      %s208 = ssub.s32 %s11, 1
    $region12: #{directed_gnn_forward.3} parent=5 // pred_fallthru
      _
    %p209 = scmp.lt.s32.totalorder %s11, 2
    // Predicated region
    $region13: #{directed_gnn_forward.3} parent=5 // pred_check
      %p210 = pneg %p209
    $region14: #{directed_gnn_forward.3} parent=5 // pred_check_branch
      %212 = sbr.rel (%p210) target = $region16
    $region15: #{directed_gnn_forward.3} parent=5 // pred_region
      // Predicated region
      $region17: #{directed_gnn_forward.3} parent=15 // pred_check
        %p213 = pneg %p54
      $region18: #{directed_gnn_forward.3} parent=15 // pred_check_branch
        %215 = sbr.rel (%p213) target = $region20
      $region19: #{directed_gnn_forward.3} parent=15 // pred_region
        %s216 = smul.u32 4, %s19
        %p217 = scmp.lt.s32.totalorder %s18, 1
        %s218 = scalar_select %p217, %s18, 1
        %p219 = scmp.lt.s32.totalorder %s216, 3
        %s220 = scalar_select %p219, %s216, 3
        %p221 = scmp.lt.s32.totalorder %s20, 0
        %s222 = scalar_select %p221, %s20, 0
        %s223 = sadd.s32 %s222, %s220
        %s224 = smul.addr %s218, 4
        %s225 = sadd.s32 %s223, %s224
        %s226 = smul.addr %s225, 8
        %s227 = scalar_lea.vmem %s0, %s226
        %s228 = smul.u32 4, %s19
      $region20: #{directed_gnn_forward.3} parent=15 // pred_fallthru
        _
      // Predicated region
      $region21: #{directed_gnn_forward.3} parent=15 // pred_check
        %p229 = pneg %p80
      $region22: #{directed_gnn_forward.3} parent=15 // pred_check_branch
        %231 = sbr.rel (%p229) target = $region24
      $region23: #{directed_gnn_forward.3} parent=15 // pred_region
        %p232 = scmp.lt.s32.totalorder %s18, 1
        %s233 = scalar_select %p232, %s18, 1
        %s234 = smul.addr %s233, 16
        %s235 = smul.addr %s234, 4
        %s236 = scalar_lea.vmem %s1, %s235
      $region24: #{directed_gnn_forward.3} parent=15 // pred_fallthru
        _
      // Predicated region
      $region25: #{directed_gnn_forward.3} parent=15 // pred_check
        %p237 = pneg %p108
      $region26: #{directed_gnn_forward.3} parent=15 // pred_check_branch
        %239 = sbr.rel (%p237) target = $region28
      $region27: #{directed_gnn_forward.3} parent=15 // pred_region
        %s240 = smul.u32 16, %s19
        %p241 = scmp.lt.s32.totalorder %s18, 1
        %s242 = scalar_select %p241, %s18, 1
        %p243 = scmp.lt.s32.totalorder %s240, 15
        %s244 = scalar_select %p243, %s240, 15
        %s245 = smul.addr %s242, 16
        %s246 = sadd.s32 %s244, %s245
        %s247 = smul.addr %s246, 8
        %s248 = scalar_lea.vmem %s2, %s247
        %s249 = smul.u32 16, %s19
      $region28: #{directed_gnn_forward.3} parent=15 // pred_fallthru
        _
      // Predicated region
      $region29: #{directed_gnn_forward.3} parent=15 // pred_check
        %p250 = pneg %p134
      $region30: #{directed_gnn_forward.3} parent=15 // pred_check_branch
        %252 = sbr.rel (%p250) target = $region32
      $region31: #{directed_gnn_forward.3} parent=15 // pred_region
        %p253 = scmp.lt.s32.totalorder %s18, 1
        %s254 = scalar_select %p253, %s18, 1
        %s255 = smul.addr %s254, 32
        %s256 = smul.addr %s255, 4
        %s257 = scalar_lea.vmem %s3, %s256
      $region32: #{directed_gnn_forward.3} parent=15 // pred_fallthru
        _
      // Predicated region
      $region33: #{directed_gnn_forward.3} parent=15 // pred_check
        %p258 = pneg %p160
      $region34: #{directed_gnn_forward.3} parent=15 // pred_check_branch
        %260 = sbr.rel (%p258) target = $region36
      $region35: #{directed_gnn_forward.3} parent=15 // pred_region
        %p261 = scmp.lt.s32.totalorder %s18, 1
        %s262 = scalar_select %p261, %s18, 1
        %s263 = scalar_lea.vmem %s4, %s262
      $region36: #{directed_gnn_forward.3} parent=15 // pred_fallthru
        _
    $region16: #{directed_gnn_forward.3} parent=5 // pred_fallthru
      _
    %p264 = scmp.le.s32.totalorder 1, %s11
    %p265 = scmp.lt.s32.totalorder %s11, 3
    %p266 = pnand %p264, %p265
    %p267 = pneg %p266
    // Predicated region
    $region37: #{directed_gnn_forward.3} parent=5 // pred_check
      _
    $region38: #{directed_gnn_forward.3} parent=5 // pred_check_branch
      %269 = sbr.rel (%p266) target = $region40
    $region39: #{directed_gnn_forward.3} parent=5 // pred_region
      %s270 = ssub.s32 %s11, 1
      %s271 = smul.u32 4, %s22
      %p272 = scmp.lt.s32.totalorder %s21, 1
      %s273 = scalar_select %p272, %s21, 1
      %p274 = scmp.lt.s32.totalorder %s271, 3
      %s275 = scalar_select %p274, %s271, 3
      %p276 = scmp.lt.s32.totalorder %s23, 0
      %s277 = scalar_select %p276, %s23, 0
      %s278 = sadd.s32 %s277, %s275
      %s279 = smul.addr %s273, 4
      %s280 = sadd.s32 %s278, %s279
      %s281 = smul.addr %s280, 8
      %s282 = scalar_lea.vmem %s0, %s281
      %p283 = pneg %p60
      %p284 = pneg %p57
      %p285 = scmp.lt.s32.totalorder %s21, 1
      %s286 = scalar_select %p285, %s21, 1
      %s287 = smul.addr %s286, 16
      %s288 = smul.addr %s287, 4
      %s289 = scalar_lea.vmem %s1, %s288
      %p290 = pneg %p86
      %p291 = pneg %p83
      %s292 = smul.u32 16, %s22
      %p293 = scmp.lt.s32.totalorder %s21, 1
      %s294 = scalar_select %p293, %s21, 1
      %p295 = scmp.lt.s32.totalorder %s292, 15
      %s296 = scalar_select %p295, %s292, 15
      %s297 = smul.addr %s294, 16
      %s298 = sadd.s32 %s296, %s297
      %s299 = smul.addr %s298, 8
      %s300 = scalar_lea.vmem %s2, %s299
      %p301 = pneg %p114
      %p302 = pneg %p111
      %p303 = scmp.lt.s32.totalorder %s21, 1
      %s304 = scalar_select %p303, %s21, 1
      %s305 = smul.addr %s304, 32
      %s306 = smul.addr %s305, 4
      %s307 = scalar_lea.vmem %s3, %s306
      %p308 = pneg %p140
      %p309 = pneg %p137
      %p310 = scmp.lt.s32.totalorder %s21, 1
      %s311 = scalar_select %p310, %s21, 1
      %s312 = scalar_lea.vmem %s4, %s311
      %p313 = pneg %p166
      %p314 = pneg %p163
      %p315 = pneg %p194
      %p316 = pneg %p191
      %s317 = smul.u32 16, %s22
      %p318 = scmp.lt.s32.totalorder %s21, 1
      %s319 = scalar_select %p318, %s21, 1
      %p320 = scmp.lt.s32.totalorder %s317, 15
      %s321 = scalar_select %p320, %s317, 15
      %s322 = smul.addr %s319, 16
      %s323 = sadd.s32 %s321, %s322
      %s324 = smul.addr %s323, 8
      %s325 = scalar_lea.vmem %s5, %s324
      %s326 = smul.u32 4, %s22
      %p327 = scmp.lt.s32.totalorder %s21, 1
      %s328 = scalar_select %p327, %s21, 1
      %p329 = scmp.lt.s32.totalorder %s326, 3
      %s330 = scalar_select %p329, %s326, 3
      %p331 = scmp.lt.s32.totalorder %s23, 0
      %s332 = scalar_select %p331, %s23, 0
      %s333 = sadd.s32 %s332, %s330
      %s334 = smul.addr %s328, 4
      %s335 = sadd.s32 %s333, %s334
      %s336 = smul.addr %s335, 8
      %s337 = scalar_lea.vmem %s0, %s336
      %s338 = smul.u32 4, %s22
      %p339 = scmp.lt.s32.totalorder %s21, 1
      %s340 = scalar_select %p339, %s21, 1
      %s341 = smul.addr %s340, 16
      %s342 = smul.addr %s341, 4
      %s343 = scalar_lea.vmem %s1, %s342
      %s344 = smul.u32 16, %s22
      %p345 = scmp.lt.s32.totalorder %s21, 1
      %s346 = scalar_select %p345, %s21, 1
      %p347 = scmp.lt.s32.totalorder %s344, 15
      %s348 = scalar_select %p347, %s344, 15
      %s349 = smul.addr %s346, 16
      %s350 = sadd.s32 %s348, %s349
      %s351 = smul.addr %s350, 8
      %s352 = scalar_lea.vmem %s2, %s351
      %s353 = smul.u32 16, %s22
      %p354 = scmp.lt.s32.totalorder %s21, 1
      %s355 = scalar_select %p354, %s21, 1
      %s356 = smul.addr %s355, 32
      %s357 = smul.addr %s356, 4
      %s358 = scalar_lea.vmem %s3, %s357
      %p359 = scmp.lt.s32.totalorder %s21, 1
      %s360 = scalar_select %p359, %s21, 1
      %s361 = scalar_lea.vmem %s4, %s360
      %s362 = smul.u32 16, %s22
      %p363 = scmp.lt.s32.totalorder %s21, 1
      %s364 = scalar_select %p363, %s21, 1
      %p365 = scmp.lt.s32.totalorder %s362, 15
      %s366 = scalar_select %p365, %s362, 15
      %s367 = smul.addr %s364, 16
      %s368 = sadd.s32 %s366, %s367
      %s369 = smul.addr %s368, 8
      %s370 = scalar_lea.vmem %s5, %s369
      %s371 = smul.u32 16, %s22
      %v373 = vld [vmem:[%s337] sm:$0xff]
      %v374 = vld [vmem:[%s337 + $0x8] sm:$0xff]
      %v375 = vld [vmem:[%s337 + $0x10] sm:$0xff]
      %v376 = vld [vmem:[%s337 + $0x18] sm:$0xff]
      %v377 = vunpack.c.l.s8.bf16 %v373
      %v378 = vunpack.c.h.s8.bf16 %v373
      %v379 = vunpack.c.l.s8.bf16 %v374
      %v380 = vunpack.c.h.s8.bf16 %v374
      %v381 = vunpack.c.l.s8.bf16 %v375
      %v382 = vunpack.c.h.s8.bf16 %v375
      %v383 = vunpack.c.l.s8.bf16 %v376
      %v384 = vunpack.c.h.s8.bf16 %v376
      %s385 = smul.u32 %s23, 128
      %s386 = sshra.s32 %s385, 3
      %s387 = sand.u32 %s385, 7
      %s388 = smul.addr %s386, 4
      %s389 = scalar_lea.vmem %s343, %s388
      %v390 = vld [vmem:[%s389] sm:$0xf]
      %v391 = vld [vmem:[%s389 + $0x4] sm:$0xf]
      %v392 = vld [vmem:[%s389 + $0x8] sm:$0xf]
      %v393 = vld [vmem:[%s389 + $0xc] sm:$0xf]
      %v394 = vld [vmem:[%s389 + $0x10] sm:$0xf]
      %v395 = vld [vmem:[%s389 + $0x14] sm:$0xf]
      %v396 = vld [vmem:[%s389 + $0x18] sm:$0xf]
      %v397 = vld [vmem:[%s389 + $0x1c] sm:$0xf]
      %v398 = vld [vmem:[%s389 + $0x20] sm:$0xf]
      %v399 = vld [vmem:[%s389 + $0x24] sm:$0xf]
      %v400 = vld [vmem:[%s389 + $0x28] sm:$0xf]
      %v401 = vld [vmem:[%s389 + $0x2c] sm:$0xf]
      %v402 = vld [vmem:[%s389 + $0x30] sm:$0xf]
      %v403 = vld [vmem:[%s389 + $0x34] sm:$0xf]
      %v404 = vld [vmem:[%s389 + $0x38] sm:$0xf]
      %v405 = vld [vmem:[%s389 + $0x3c] sm:$0xf]
      %v422 = vunpack.c.l.b16 %v390
      %v423 = vunpack.c.l.b16 %v391
      %v424 = vunpack.c.l.b16 %v392
      %v425 = vunpack.c.l.b16 %v393
      %v426 = vunpack.c.l.b16 %v394
      %v427 = vunpack.c.l.b16 %v395
      %v428 = vunpack.c.l.b16 %v396
      %v429 = vunpack.c.l.b16 %v397
      %v430 = vunpack.c.l.b16 %v398
      %v431 = vunpack.c.l.b16 %v399
      %v432 = vunpack.c.l.b16 %v400
      %v433 = vunpack.c.l.b16 %v401
      %v434 = vunpack.c.l.b16 %v402
      %v435 = vunpack.c.l.b16 %v403
      %v436 = vunpack.c.l.b16 %v404
      %v437 = vunpack.c.l.b16 %v405
      %v438 = vpack.c.b16 %v423, %v422
      %v439 = vpack.c.b16 %v425, %v424
      %v440 = vpack.c.b16 %v427, %v426
      %v441 = vpack.c.b16 %v429, %v428
      %v442 = vpack.c.b16 %v431, %v430
      %v443 = vpack.c.b16 %v433, %v432
      %v444 = vpack.c.b16 %v435, %v434
      %v445 = vpack.c.b16 %v437, %v436
      %454 = vmatprep.subr.bf16.mxu0 0
      %455 = vmatpush1.bf16.msra.mxu0 %v438
      %456 = vmatprep.subr.bf16.mxu0 0
      %457 = vmatpush1.bf16.msra.mxu0 %v439
      %458 = vmatprep.subr.bf16.mxu0 0
      %459 = vmatpush1.bf16.msra.mxu0 %v440
      %460 = vmatprep.subr.bf16.mxu0 0
      %461 = vmatpush1.bf16.msra.mxu0 %v441
      %462 = vmatprep.subr.bf16.mxu0 0
      %463 = vmatpush1.bf16.msra.mxu0 %v442
      %464 = vmatprep.subr.bf16.mxu0 0
      %465 = vmatpush1.bf16.msra.mxu0 %v443
      %466 = vmatprep.subr.bf16.mxu0 0
      %467 = vmatpush1.bf16.msra.mxu0 %v444
      %468 = vmatprep.subr.bf16.mxu0 0
      %469 = vmatpush1.bf16.msra.mxu0 %v445
      %470 = vmatprep.subr.bf16.mxu0 0
      %471 = vmatpush1.bf16.msra.mxu0 0
      %472 = vmatprep.subr.bf16.mxu0 0
      %473 = vmatpush1.bf16.msra.mxu0 0
      %474 = vmatprep.subr.bf16.mxu0 0
      %475 = vmatpush1.bf16.msra.mxu0 0
      %476 = vmatprep.subr.bf16.mxu0 0
      %477 = vmatpush1.bf16.msra.mxu0 0
      %478 = vmatprep.subr.bf16.mxu0 0
      %479 = vmatpush1.bf16.msra.mxu0 0
      %480 = vmatprep.subr.bf16.mxu0 0
      %481 = vmatpush1.bf16.msra.mxu0 0
      %482 = vmatprep.subr.bf16.mxu0 0
      %483 = vmatpush1.bf16.msra.mxu0 0
      %484 = vmatprep.subr.bf16.mxu0 0
      %485 = vmatpush1.bf16.msra.mxu0 0
      %486 = vmatprep.mubr.bf16.mxu0 0
      %487 = vmatmul.mubr.bf16.gmra.mrb[0].mxu0 %v377
      %v488 = vpop.f32.mrb[0].mxu0
      %v489 = vadd.f32 0.0, %v488
      %v490 = vpop.f32.mrb[0].mxu0
      %v491 = vpop.f32.mrb[0].mxu0
      %v492 = vadd.f32 0.0, %v491
      %v493 = vpop.f32.mrb[0].mxu0
      %494 = vmatprep.mubr.bf16.mxu0 0
      %495 = vmatmul.mubr.bf16.gmra.mrb[0].mxu0 %v378
      %v496 = vpop.f32.mrb[0].mxu0
      %v497 = vadd.f32 0.0, %v496
      %v498 = vpop.f32.mrb[0].mxu0
      %v499 = vpop.f32.mrb[0].mxu0
      %v500 = vadd.f32 0.0, %v499
      %v501 = vpop.f32.mrb[0].mxu0
      %502 = vmatprep.mubr.bf16.mxu0 0
      %503 = vmatmul.mubr.bf16.gmra.mrb[0].mxu0 %v379
      %v504 = vpop.f32.mrb[0].mxu0
      %v505 = vadd.f32 0.0, %v504
      %v506 = vpop.f32.mrb[0].mxu0
      %v507 = vpop.f32.mrb[0].mxu0
      %v508 = vadd.f32 0.0, %v507
      %v509 = vpop.f32.mrb[0].mxu0
      %510 = vmatprep.mubr.bf16.mxu0 0
      %511 = vmatmul.mubr.bf16.gmra.mrb[0].mxu0 %v380
      %v512 = vpop.f32.mrb[0].mxu0
      %v513 = vadd.f32 0.0, %v512
      %v514 = vpop.f32.mrb[0].mxu0
      %v515 = vpop.f32.mrb[0].mxu0
      %v516 = vadd.f32 0.0, %v515
      %v517 = vpop.f32.mrb[0].mxu0
      %518 = vmatprep.mubr.bf16.mxu0 0
      %519 = vmatmul.mubr.bf16.gmra.mrb[0].mxu0 %v381
      %v520 = vpop.f32.mrb[0].mxu0
      %v521 = vadd.f32 0.0, %v520
      %v522 = vpop.f32.mrb[0].mxu0
      %v523 = vpop.f32.mrb[0].mxu0
      %v524 = vadd.f32 0.0, %v523
      %v525 = vpop.f32.mrb[0].mxu0
      %526 = vmatprep.mubr.bf16.mxu0 0
      %527 = vmatmul.mubr.bf16.gmra.mrb[0].mxu0 %v382
      %v528 = vpop.f32.mrb[0].mxu0
      %v529 = vadd.f32 0.0, %v528
      %v530 = vpop.f32.mrb[0].mxu0
      %v531 = vpop.f32.mrb[0].mxu0
      %v532 = vadd.f32 0.0, %v531
      %v533 = vpop.f32.mrb[0].mxu0
      %534 = vmatprep.mubr.bf16.mxu0 0
      %535 = vmatmul.mubr.bf16.gmra.mrb[0].mxu0 %v383
      %v536 = vpop.f32.mrb[0].mxu0
      %v537 = vadd.f32 0.0, %v536
      %v538 = vpop.f32.mrb[0].mxu0
      %v539 = vpop.f32.mrb[0].mxu0
      %v540 = vadd.f32 0.0, %v539
      %v541 = vpop.f32.mrb[0].mxu0
      %542 = vmatprep.mubr.bf16.mxu0 0
      %543 = vmatmul.mubr.bf16.gmra.mrb[0].mxu0 %v384
      %v544 = vpop.f32.mrb[0].mxu0
      %v545 = vadd.f32 0.0, %v544
      %v546 = vpop.f32.mrb[0].mxu0
      %v547 = vpop.f32.mrb[0].mxu0
      %v548 = vadd.f32 0.0, %v547
      %v549 = vpop.f32.mrb[0].mxu0
      %550 = vdwg.mxu0
      %p551 = scmp.eq.s32.totalorder %s23, 0
      // Predicated region
      $region41: #{directed_gnn_forward.3} parent=39 // pred_check
        %p552 = pneg %p551
      $region42: #{directed_gnn_forward.3} parent=39 // pred_check_branch
        %554 = sbr.rel (%p552) target = $region44
      $region43: #{directed_gnn_forward.3} parent=39 // pred_region
        %s555 = smul.u32 %s22, 128
        %556 = vst [vmem:[#allocation2] sm:$0xff] %v489
        %557 = vst [vmem:[#allocation2 + $0x10] sm:$0xff] %v492
        %558 = vst [vmem:[#allocation2 + $0x20] sm:$0xff] %v497
        %559 = vst [vmem:[#allocation2 + $0x30] sm:$0xff] %v500
        %560 = vst [vmem:[#allocation2 + $0x40] sm:$0xff] %v505
        %561 = vst [vmem:[#allocation2 + $0x50] sm:$0xff] %v508
        %562 = vst [vmem:[#allocation2 + $0x60] sm:$0xff] %v513
        %563 = vst [vmem:[#allocation2 + $0x70] sm:$0xff] %v516
        %564 = vst [vmem:[#allocation2 + $0x80] sm:$0xff] %v521
        %565 = vst [vmem:[#allocation2 + $0x90] sm:$0xff] %v524
        %566 = vst [vmem:[#allocation2 + $0xa0] sm:$0xff] %v529
        %567 = vst [vmem:[#allocation2 + $0xb0] sm:$0xff] %v532
        %568 = vst [vmem:[#allocation2 + $0xc0] sm:$0xff] %v537
        %569 = vst [vmem:[#allocation2 + $0xd0] sm:$0xff] %v540
        %570 = vst [vmem:[#allocation2 + $0xe0] sm:$0xff] %v545
        %571 = vst [vmem:[#allocation2 + $0xf0] sm:$0xff] %v548
        %s572 = sshra.s32 %s555, 3
        %s573 = sand.u32 %s555, 7
        %s574 = smul.addr %s572, 4
        %s575 = scalar_lea.vmem %s343, %s574
        %v576 = vld [vmem:[%s575] sm:$0xf]
        %v577 = vld [vmem:[%s575 + $0x4] sm:$0xf]
        %v578 = vld [vmem:[%s575 + $0x8] sm:$0xf]
        %v579 = vld [vmem:[%s575 + $0xc] sm:$0xf]
        %v580 = vld [vmem:[%s575 + $0x10] sm:$0xf]
        %v581 = vld [vmem:[%s575 + $0x14] sm:$0xf]
        %v582 = vld [vmem:[%s575 + $0x18] sm:$0xf]
        %v583 = vld [vmem:[%s575 + $0x1c] sm:$0xf]
        %v584 = vld [vmem:[%s575 + $0x20] sm:$0xf]
        %v585 = vld [vmem:[%s575 + $0x24] sm:$0xf]
        %v586 = vld [vmem:[%s575 + $0x28] sm:$0xf]
        %v587 = vld [vmem:[%s575 + $0x2c] sm:$0xf]
        %v588 = vld [vmem:[%s575 + $0x30] sm:$0xf]
        %v589 = vld [vmem:[%s575 + $0x34] sm:$0xf]
        %v590 = vld [vmem:[%s575 + $0x38] sm:$0xf]
        %v591 = vld [vmem:[%s575 + $0x3c] sm:$0xf]
        %v592 = vunpack.c.l.bf16 %v576
        %v593 = vunpack.c.l.bf16 %v577
        %v594 = vunpack.c.l.bf16 %v578
        %v595 = vunpack.c.l.bf16 %v579
        %v596 = vunpack.c.l.bf16 %v580
        %v597 = vunpack.c.l.bf16 %v581
        %v598 = vunpack.c.l.bf16 %v582
        %v599 = vunpack.c.l.bf16 %v583
        %v600 = vunpack.c.l.bf16 %v584
        %v601 = vunpack.c.l.bf16 %v585
        %v602 = vunpack.c.l.bf16 %v586
        %v603 = vunpack.c.l.bf16 %v587
        %v604 = vunpack.c.l.bf16 %v588
        %v605 = vunpack.c.l.bf16 %v589
        %v606 = vunpack.c.l.bf16 %v590
        %v607 = vunpack.c.l.bf16 %v591
        %608 = vst [vmem:[#allocation2 + $0x8] sm:$0xff] %v592
        %609 = vst [vmem:[#allocation2 + $0x18] sm:$0xff] %v593
        %610 = vst [vmem:[#allocation2 + $0x28] sm:$0xff] %v594
        %611 = vst [vmem:[#allocation2 + $0x38] sm:$0xff] %v595
        %612 = vst [vmem:[#allocation2 + $0x48] sm:$0xff] %v596
        %613 = vst [vmem:[#allocation2 + $0x58] sm:$0xff] %v597
        %614 = vst [vmem:[#allocation2 + $0x68] sm:$0xff] %v598
        %615 = vst [vmem:[#allocation2 + $0x78] sm:$0xff] %v599
        %616 = vst [vmem:[#allocation2 + $0x88] sm:$0xff] %v600
        %617 = vst [vmem:[#allocation2 + $0x98] sm:$0xff] %v601
        %618 = vst [vmem:[#allocation2 + $0xa8] sm:$0xff] %v602
        %619 = vst [vmem:[#allocation2 + $0xb8] sm:$0xff] %v603
        %620 = vst [vmem:[#allocation2 + $0xc8] sm:$0xff] %v604
        %621 = vst [vmem:[#allocation2 + $0xd8] sm:$0xff] %v605
        %622 = vst [vmem:[#allocation2 + $0xe8] sm:$0xff] %v606
        %623 = vst [vmem:[#allocation2 + $0xf8] sm:$0xff] %v607
      $region44: #{directed_gnn_forward.3} parent=39 // pred_fallthru
        _
      %p624 = scmp.gt.s32.totalorder %s23, 0
      // Predicated region
      $region45: #{directed_gnn_forward.3} parent=39 // pred_check
        %p625 = pneg %p624
      $region46: #{directed_gnn_forward.3} parent=39 // pred_check_branch
        %627 = sbr.rel (%p625) target = $region48
      $region47: #{directed_gnn_forward.3} parent=39 // pred_region
        %v628 = vld [vmem:[#allocation2] sm:$0xff]
        %v629 = vld [vmem:[#allocation2 + $0x10] sm:$0xff]
        %v630 = vld [vmem:[#allocation2 + $0x20] sm:$0xff]
        %v631 = vld [vmem:[#allocation2 + $0x30] sm:$0xff]
        %v632 = vld [vmem:[#allocation2 + $0x40] sm:$0xff]
        %v633 = vld [vmem:[#allocation2 + $0x50] sm:$0xff]
        %v634 = vld [vmem:[#allocation2 + $0x60] sm:$0xff]
        %v635 = vld [vmem:[#allocation2 + $0x70] sm:$0xff]
        %v636 = vld [vmem:[#allocation2 + $0x80] sm:$0xff]
        %v637 = vld [vmem:[#allocation2 + $0x90] sm:$0xff]
        %v638 = vld [vmem:[#allocation2 + $0xa0] sm:$0xff]
        %v639 = vld [vmem:[#allocation2 + $0xb0] sm:$0xff]
        %v640 = vld [vmem:[#allocation2 + $0xc0] sm:$0xff]
        %v641 = vld [vmem:[#allocation2 + $0xd0] sm:$0xff]
        %v642 = vld [vmem:[#allocation2 + $0xe0] sm:$0xff]
        %v643 = vld [vmem:[#allocation2 + $0xf0] sm:$0xff]
        %v644 = vadd.f32 %v628, %v489
        %v645 = vadd.f32 %v629, %v492
        %v646 = vadd.f32 %v630, %v497
        %v647 = vadd.f32 %v631, %v500
        %v648 = vadd.f32 %v632, %v505
        %v649 = vadd.f32 %v633, %v508
        %v650 = vadd.f32 %v634, %v513
        %v651 = vadd.f32 %v635, %v516
        %v652 = vadd.f32 %v636, %v521
        %v653 = vadd.f32 %v637, %v524
        %v654 = vadd.f32 %v638, %v529
        %v655 = vadd.f32 %v639, %v532
        %v656 = vadd.f32 %v640, %v537
        %v657 = vadd.f32 %v641, %v540
        %v658 = vadd.f32 %v642, %v545
        %v659 = vadd.f32 %v643, %v548
        %660 = vst [vmem:[#allocation2] sm:$0xff] %v644
        %661 = vst [vmem:[#allocation2 + $0x10] sm:$0xff] %v645
        %662 = vst [vmem:[#allocation2 + $0x20] sm:$0xff] %v646
        %663 = vst [vmem:[#allocation2 + $0x30] sm:$0xff] %v647
        %664 = vst [vmem:[#allocation2 + $0x40] sm:$0xff] %v648
        %665 = vst [vmem:[#allocation2 + $0x50] sm:$0xff] %v649
        %666 = vst [vmem:[#allocation2 + $0x60] sm:$0xff] %v650
        %667 = vst [vmem:[#allocation2 + $0x70] sm:$0xff] %v651
        %668 = vst [vmem:[#allocation2 + $0x80] sm:$0xff] %v652
        %669 = vst [vmem:[#allocation2 + $0x90] sm:$0xff] %v653
        %670 = vst [vmem:[#allocation2 + $0xa0] sm:$0xff] %v654
        %671 = vst [vmem:[#allocation2 + $0xb0] sm:$0xff] %v655
        %672 = vst [vmem:[#allocation2 + $0xc0] sm:$0xff] %v656
        %673 = vst [vmem:[#allocation2 + $0xd0] sm:$0xff] %v657
        %674 = vst [vmem:[#allocation2 + $0xe0] sm:$0xff] %v658
        %675 = vst [vmem:[#allocation2 + $0xf0] sm:$0xff] %v659
      $region48: #{directed_gnn_forward.3} parent=39 // pred_fallthru
        _
      // Predicated region
      $region49: #{directed_gnn_forward.3} parent=39 // pred_check
        %p676 = pneg %p551
      $region50: #{directed_gnn_forward.3} parent=39 // pred_check_branch
        %678 = sbr.rel (%p676) target = $region52
      $region51: #{directed_gnn_forward.3} parent=39 // pred_region
        %v679 = vld [vmem:[#allocation2] sm:$0xff]
        %v680 = vld [vmem:[#allocation2 + $0x10] sm:$0xff]
        %v681 = vld [vmem:[#allocation2 + $0x20] sm:$0xff]
        %v682 = vld [vmem:[#allocation2 + $0x30] sm:$0xff]
        %v683 = vld [vmem:[#allocation2 + $0x40] sm:$0xff]
        %v684 = vld [vmem:[#allocation2 + $0x50] sm:$0xff]
        %v685 = vld [vmem:[#allocation2 + $0x60] sm:$0xff]
        %v686 = vld [vmem:[#allocation2 + $0x70] sm:$0xff]
        %v687 = vld [vmem:[#allocation2 + $0x80] sm:$0xff]
        %v688 = vld [vmem:[#allocation2 + $0x90] sm:$0xff]
        %v689 = vld [vmem:[#allocation2 + $0xa0] sm:$0xff]
        %v690 = vld [vmem:[#allocation2 + $0xb0] sm:$0xff]
        %v691 = vld [vmem:[#allocation2 + $0xc0] sm:$0xff]
        %v692 = vld [vmem:[#allocation2 + $0xd0] sm:$0xff]
        %v693 = vld [vmem:[#allocation2 + $0xe0] sm:$0xff]
        %v694 = vld [vmem:[#allocation2 + $0xf0] sm:$0xff]
        %v695 = vld [vmem:[%s352] sm:$0xff]
        %v696 = vld [vmem:[%s352 + $0x8] sm:$0xff]
        %v697 = vld [vmem:[%s352 + $0x10] sm:$0xff]
        %v698 = vld [vmem:[%s352 + $0x18] sm:$0xff]
        %v699 = vld [vmem:[%s352 + $0x20] sm:$0xff]
        %v700 = vld [vmem:[%s352 + $0x28] sm:$0xff]
        %v701 = vld [vmem:[%s352 + $0x30] sm:$0xff]
        %v702 = vld [vmem:[%s352 + $0x38] sm:$0xff]
        %v703 = vld [vmem:[%s352 + $0x40] sm:$0xff]
        %v704 = vld [vmem:[%s352 + $0x48] sm:$0xff]
        %v705 = vld [vmem:[%s352 + $0x50] sm:$0xff]
        %v706 = vld [vmem:[%s352 + $0x58] sm:$0xff]
        %v707 = vld [vmem:[%s352 + $0x60] sm:$0xff]
        %v708 = vld [vmem:[%s352 + $0x68] sm:$0xff]
        %v709 = vld [vmem:[%s352 + $0x70] sm:$0xff]
        %v710 = vld [vmem:[%s352 + $0x78] sm:$0xff]
        %712 = vset.pattern.permute.xlu0 0
        %713 = vperm.xlu0 %712, %v695
        %v714 = vpop.permute.xlu0 %713
        %717 = vset.pattern.permute.xlu0 0
        %718 = vperm.xlu0 %717, %v696
        %v719 = vpop.permute.xlu0 %718
        %722 = vset.pattern.permute.xlu0 0
        %723 = vperm.xlu0 %722, %v697
        %v724 = vpop.permute.xlu0 %723
        %727 = vset.pattern.permute.xlu0 0
        %728 = vperm.xlu0 %727, %v698
        %v729 = vpop.permute.xlu0 %728
        %732 = vset.pattern.permute.xlu0 0
        %733 = vperm.xlu0 %732, %v699
        %v734 = vpop.permute.xlu0 %733
        %737 = vset.pattern.permute.xlu0 0
        %738 = vperm.xlu0 %737, %v700
        %v739 = vpop.permute.xlu0 %738
        %742 = vset.pattern.permute.xlu0 0
        %743 = vperm.xlu0 %742, %v701
        %v744 = vpop.permute.xlu0 %743
        %747 = vset.pattern.permute.xlu0 0
        %748 = vperm.xlu0 %747, %v702
        %v749 = vpop.permute.xlu0 %748
        %752 = vset.pattern.permute.xlu0 0
        %753 = vperm.xlu0 %752, %v703
        %v754 = vpop.permute.xlu0 %753
        %757 = vset.pattern.permute.xlu0 0
        %758 = vperm.xlu0 %757, %v704
        %v759 = vpop.permute.xlu0 %758
        %762 = vset.pattern.permute.xlu0 0
        %763 = vperm.xlu0 %762, %v705
        %v764 = vpop.permute.xlu0 %763
        %767 = vset.pattern.permute.xlu0 0
        %768 = vperm.xlu0 %767, %v706
        %v769 = vpop.permute.xlu0 %768
        %772 = vset.pattern.permute.xlu0 0
        %773 = vperm.xlu0 %772, %v707
        %v774 = vpop.permute.xlu0 %773
        %777 = vset.pattern.permute.xlu0 0
        %778 = vperm.xlu0 %777, %v708
        %v779 = vpop.permute.xlu0 %778
        %782 = vset.pattern.permute.xlu0 0
        %783 = vperm.xlu0 %782, %v709
        %v784 = vpop.permute.xlu0 %783
        %787 = vset.pattern.permute.xlu0 0
        %788 = vperm.xlu0 %787, %v710
        %v789 = vpop.permute.xlu0 %788
        %v791 = vmul.f32 %v679, %v714
        %v792 = vmul.f32 %v680, %v719
        %v793 = vmul.f32 %v681, %v724
        %v794 = vmul.f32 %v682, %v729
        %v795 = vmul.f32 %v683, %v734
        %v796 = vmul.f32 %v684, %v739
        %v797 = vmul.f32 %v685, %v744
        %v798 = vmul.f32 %v686, %v749
        %v799 = vmul.f32 %v687, %v754
        %v800 = vmul.f32 %v688, %v759
        %v801 = vmul.f32 %v689, %v764
        %v802 = vmul.f32 %v690, %v769
        %v803 = vmul.f32 %v691, %v774
        %v804 = vmul.f32 %v692, %v779
        %v805 = vmul.f32 %v693, %v784
        %v806 = vmul.f32 %v694, %v789
        %807 = vst [vmem:[#allocation2] sm:$0xff] %v791
        %808 = vst [vmem:[#allocation2 + $0x10] sm:$0xff] %v792
        %809 = vst [vmem:[#allocation2 + $0x20] sm:$0xff] %v793
        %810 = vst [vmem:[#allocation2 + $0x30] sm:$0xff] %v794
        %811 = vst [vmem:[#allocation2 + $0x40] sm:$0xff] %v795
        %812 = vst [vmem:[#allocation2 + $0x50] sm:$0xff] %v796
        %813 = vst [vmem:[#allocation2 + $0x60] sm:$0xff] %v797
        %814 = vst [vmem:[#allocation2 + $0x70] sm:$0xff] %v798
        %815 = vst [vmem:[#allocation2 + $0x80] sm:$0xff] %v799
        %816 = vst [vmem:[#allocation2 + $0x90] sm:$0xff] %v800
        %817 = vst [vmem:[#allocation2 + $0xa0] sm:$0xff] %v801
        %818 = vst [vmem:[#allocation2 + $0xb0] sm:$0xff] %v802
        %819 = vst [vmem:[#allocation2 + $0xc0] sm:$0xff] %v803
        %820 = vst [vmem:[#allocation2 + $0xd0] sm:$0xff] %v804
        %821 = vst [vmem:[#allocation2 + $0xe0] sm:$0xff] %v805
        %822 = vst [vmem:[#allocation2 + $0xf0] sm:$0xff] %v806
        %v823 = vld [vmem:[#allocation2] sm:$0xff]
        %v824 = vld [vmem:[#allocation2 + $0x8] sm:$0xff]
        %v825 = vld [vmem:[#allocation2 + $0x10] sm:$0xff]
        %v826 = vld [vmem:[#allocation2 + $0x18] sm:$0xff]
        %v827 = vld [vmem:[#allocation2 + $0x20] sm:$0xff]
        %v828 = vld [vmem:[#allocation2 + $0x28] sm:$0xff]
        %v829 = vld [vmem:[#allocation2 + $0x30] sm:$0xff]
        %v830 = vld [vmem:[#allocation2 + $0x38] sm:$0xff]
        %v831 = vld [vmem:[#allocation2 + $0x40] sm:$0xff]
        %v832 = vld [vmem:[#allocation2 + $0x48] sm:$0xff]
        %v833 = vld [vmem:[#allocation2 + $0x50] sm:$0xff]
        %v834 = vld [vmem:[#allocation2 + $0x58] sm:$0xff]
        %v835 = vld [vmem:[#allocation2 + $0x60] sm:$0xff]
        %v836 = vld [vmem:[#allocation2 + $0x68] sm:$0xff]
        %v837 = vld [vmem:[#allocation2 + $0x70] sm:$0xff]
        %v838 = vld [vmem:[#allocation2 + $0x78] sm:$0xff]
        %v839 = vld [vmem:[#allocation2 + $0x80] sm:$0xff]
        %v840 = vld [vmem:[#allocation2 + $0x88] sm:$0xff]
        %v841 = vld [vmem:[#allocation2 + $0x90] sm:$0xff]
        %v842 = vld [vmem:[#allocation2 + $0x98] sm:$0xff]
        %v843 = vld [vmem:[#allocation2 + $0xa0] sm:$0xff]
        %v844 = vld [vmem:[#allocation2 + $0xa8] sm:$0xff]
        %v845 = vld [vmem:[#allocation2 + $0xb0] sm:$0xff]
        %v846 = vld [vmem:[#allocation2 + $0xb8] sm:$0xff]
        %v847 = vld [vmem:[#allocation2 + $0xc0] sm:$0xff]
        %v848 = vld [vmem:[#allocation2 + $0xc8] sm:$0xff]
        %v849 = vld [vmem:[#allocation2 + $0xd0] sm:$0xff]
        %v850 = vld [vmem:[#allocation2 + $0xd8] sm:$0xff]
        %v851 = vld [vmem:[#allocation2 + $0xe0] sm:$0xff]
        %v852 = vld [vmem:[#allocation2 + $0xe8] sm:$0xff]
        %v853 = vld [vmem:[#allocation2 + $0xf0] sm:$0xff]
        %v854 = vld [vmem:[#allocation2 + $0xf8] sm:$0xff]
        %v855 = vpack.c.bf16 %v825, %v823
        %v856 = vpack.c.bf16 %v826, %v824
        %v857 = vpack.c.bf16 %v829, %v827
        %v858 = vpack.c.bf16 %v830, %v828
        %v859 = vpack.c.bf16 %v833, %v831
        %v860 = vpack.c.bf16 %v834, %v832
        %v861 = vpack.c.bf16 %v837, %v835
        %v862 = vpack.c.bf16 %v838, %v836
        %v863 = vpack.c.bf16 %v841, %v839
        %v864 = vpack.c.bf16 %v842, %v840
        %v865 = vpack.c.bf16 %v845, %v843
        %v866 = vpack.c.bf16 %v846, %v844
        %v867 = vpack.c.bf16 %v849, %v847
        %v868 = vpack.c.bf16 %v850, %v848
        %v869 = vpack.c.bf16 %v853, %v851
        %v870 = vpack.c.bf16 %v854, %v852
        %v871 = vld [vmem:[%s358] sm:$0xf]
        %v872 = vld [vmem:[%s358 + $0x4] sm:$0xf]
        %v873 = vld [vmem:[%s358 + $0x8] sm:$0xf]
        %v874 = vld [vmem:[%s358 + $0xc] sm:$0xf]
        %v875 = vld [vmem:[%s358 + $0x10] sm:$0xf]
        %v876 = vld [vmem:[%s358 + $0x14] sm:$0xf]
        %v877 = vld [vmem:[%s358 + $0x18] sm:$0xf]
        %v878 = vld [vmem:[%s358 + $0x1c] sm:$0xf]
        %v879 = vld [vmem:[%s358 + $0x20] sm:$0xf]
        %v880 = vld [vmem:[%s358 + $0x24] sm:$0xf]
        %v881 = vld [vmem:[%s358 + $0x28] sm:$0xf]
        %v882 = vld [vmem:[%s358 + $0x2c] sm:$0xf]
        %v883 = vld [vmem:[%s358 + $0x30] sm:$0xf]
        %v884 = vld [vmem:[%s358 + $0x34] sm:$0xf]
        %v885 = vld [vmem:[%s358 + $0x38] sm:$0xf]
        %v886 = vld [vmem:[%s358 + $0x3c] sm:$0xf]
        %v887 = vld [vmem:[%s358 + $0x40] sm:$0xf]
        %v888 = vld [vmem:[%s358 + $0x44] sm:$0xf]
        %v889 = vld [vmem:[%s358 + $0x48] sm:$0xf]
        %v890 = vld [vmem:[%s358 + $0x4c] sm:$0xf]
        %v891 = vld [vmem:[%s358 + $0x50] sm:$0xf]
        %v892 = vld [vmem:[%s358 + $0x54] sm:$0xf]
        %v893 = vld [vmem:[%s358 + $0x58] sm:$0xf]
        %v894 = vld [vmem:[%s358 + $0x5c] sm:$0xf]
        %v895 = vld [vmem:[%s358 + $0x60] sm:$0xf]
        %v896 = vld [vmem:[%s358 + $0x64] sm:$0xf]
        %v897 = vld [vmem:[%s358 + $0x68] sm:$0xf]
        %v898 = vld [vmem:[%s358 + $0x6c] sm:$0xf]
        %v899 = vld [vmem:[%s358 + $0x70] sm:$0xf]
        %v900 = vld [vmem:[%s358 + $0x74] sm:$0xf]
        %v901 = vld [vmem:[%s358 + $0x78] sm:$0xf]
        %v902 = vld [vmem:[%s358 + $0x7c] sm:$0xf]
        %v903 = vld [vmem:[%s361] sm:$0x1]
        %v905 = vlaneseq
        %v906 = vshrl.u32 %v905, 7
        %v907 = vsub.s32 0, %v906
        %v908 = vrot.slane %v903, %v907
        %v942 = vunpack.c.l.b16 %v871
        %v943 = vunpack.c.l.b16 %v872
        %v944 = vunpack.c.l.b16 %v873
        %v945 = vunpack.c.l.b16 %v874
        %v946 = vunpack.c.l.b16 %v875
        %v947 = vunpack.c.l.b16 %v876
        %v948 = vunpack.c.l.b16 %v877
        %v949 = vunpack.c.l.b16 %v878
        %v950 = vunpack.c.l.b16 %v879
        %v951 = vunpack.c.l.b16 %v880
        %v952 = vunpack.c.l.b16 %v881
        %v953 = vunpack.c.l.b16 %v882
        %v954 = vunpack.c.l.b16 %v883
        %v955 = vunpack.c.l.b16 %v884
        %v956 = vunpack.c.l.b16 %v885
        %v957 = vunpack.c.l.b16 %v886
        %v958 = vunpack.c.l.b16 %v887
        %v959 = vunpack.c.l.b16 %v888
        %v960 = vunpack.c.l.b16 %v889
        %v961 = vunpack.c.l.b16 %v890
        %v962 = vunpack.c.l.b16 %v891
        %v963 = vunpack.c.l.b16 %v892
        %v964 = vunpack.c.l.b16 %v893
        %v965 = vunpack.c.l.b16 %v894
        %v966 = vunpack.c.l.b16 %v895
        %v967 = vunpack.c.l.b16 %v896
        %v968 = vunpack.c.l.b16 %v897
        %v969 = vunpack.c.l.b16 %v898
        %v970 = vunpack.c.l.b16 %v899
        %v971 = vunpack.c.l.b16 %v900
        %v972 = vunpack.c.l.b16 %v901
        %v973 = vunpack.c.l.b16 %v902
        %v974 = vpack.c.b16 %v943, %v942
        %v975 = vpack.c.b16 %v945, %v944
        %v976 = vpack.c.b16 %v947, %v946
        %v977 = vpack.c.b16 %v949, %v948
        %v978 = vpack.c.b16 %v951, %v950
        %v979 = vpack.c.b16 %v953, %v952
        %v980 = vpack.c.b16 %v955, %v954
        %v981 = vpack.c.b16 %v957, %v956
        %v982 = vpack.c.b16 %v959, %v958
        %v983 = vpack.c.b16 %v961, %v960
        %v984 = vpack.c.b16 %v963, %v962
        %v985 = vpack.c.b16 %v965, %v964
        %v986 = vpack.c.b16 %v967, %v966
        %v987 = vpack.c.b16 %v969, %v968
        %v988 = vpack.c.b16 %v971, %v970
        %v989 = vpack.c.b16 %v973, %v972
        %1006 = vmatprep.subr.bf16.mxu0 0
        %1007 = vmatpush1.bf16.msra.mxu0 %v974
        %1008 = vmatprep.subr.bf16.mxu0 0
        %1009 = vmatpush1.bf16.msra.mxu0 %v975
        %1010 = vmatprep.subr.bf16.mxu0 0
        %1011 = vmatpush1.bf16.msra.mxu0 %v976
        %1012 = vmatprep.subr.bf16.mxu0 0
        %1013 = vmatpush1.bf16.msra.mxu0 %v977
        %1014 = vmatprep.subr.bf16.mxu0 0
        %1015 = vmatpush1.bf16.msra.mxu0 %v978
        %1016 = vmatprep.subr.bf16.mxu0 0
        %1017 = vmatpush1.bf16.msra.mxu0 %v979
        %1018 = vmatprep.subr.bf16.mxu0 0
        %1019 = vmatpush1.bf16.msra.mxu0 %v980
        %1020 = vmatprep.subr.bf16.mxu0 0
        %1021 = vmatpush1.bf16.msra.mxu0 %v981
        %1022 = vmatprep.subr.bf16.mxu0 0
        %1023 = vmatpush1.bf16.msra.mxu0 %v982
        %1024 = vmatprep.subr.bf16.mxu0 0
        %1025 = vmatpush1.bf16.msra.mxu0 %v983
        %1026 = vmatprep.subr.bf16.mxu0 0
        %1027 = vmatpush1.bf16.msra.mxu0 %v984
        %1028 = vmatprep.subr.bf16.mxu0 0
        %1029 = vmatpush1.bf16.msra.mxu0 %v985
        %1030 = vmatprep.subr.bf16.mxu0 0
        %1031 = vmatpush1.bf16.msra.mxu0 %v986
        %1032 = vmatprep.subr.bf16.mxu0 0
        %1033 = vmatpush1.bf16.msra.mxu0 %v987
        %1034 = vmatprep.subr.bf16.mxu0 0
        %1035 = vmatpush1.bf16.msra.mxu0 %v988
        %1036 = vmatprep.subr.bf16.mxu0 0
        %1037 = vmatpush1.bf16.msra.mxu0 %v989
        %1038 = vmatprep.mubr.bf16.mxu0 %v856
        %1039 = vmatmul.mubr.bf16.gmra.mrb[0].mxu0 %v855
        %v1040 = vpop.f32.mrb[0].mxu0
        %v1041 = vadd.f32 %v908, %v1040
        %v1042 = vpop.f32.mrb[0].mxu0
        %v1043 = vpop.f32.mrb[0].mxu0
        %v1044 = vadd.f32 %v908, %v1043
        %v1045 = vpop.f32.mrb[0].mxu0
        %1046 = vmatprep.mubr.bf16.mxu0 %v858
        %1047 = vmatmul.mubr.bf16.gmra.mrb[0].mxu0 %v857
        %v1048 = vpop.f32.mrb[0].mxu0
        %v1049 = vadd.f32 %v908, %v1048
        %v1050 = vpop.f32.mrb[0].mxu0
        %v1051 = vpop.f32.mrb[0].mxu0
        %v1052 = vadd.f32 %v908, %v1051
        %v1053 = vpop.f32.mrb[0].mxu0
        %1054 = vmatprep.mubr.bf16.mxu0 %v860
        %1055 = vmatmul.mubr.bf16.gmra.mrb[0].mxu0 %v859
        %v1056 = vpop.f32.mrb[0].mxu0
        %v1057 = vadd.f32 %v908, %v1056
        %v1058 = vpop.f32.mrb[0].mxu0
        %v1059 = vpop.f32.mrb[0].mxu0
        %v1060 = vadd.f32 %v908, %v1059
        %v1061 = vpop.f32.mrb[0].mxu0
        %1062 = vmatprep.mubr.bf16.mxu0 %v862
        %1063 = vmatmul.mubr.bf16.gmra.mrb[0].mxu0 %v861
        %v1064 = vpop.f32.mrb[0].mxu0
        %v1065 = vadd.f32 %v908, %v1064
        %v1066 = vpop.f32.mrb[0].mxu0
        %v1067 = vpop.f32.mrb[0].mxu0
        %v1068 = vadd.f32 %v908, %v1067
        %v1069 = vpop.f32.mrb[0].mxu0
        %1070 = vmatprep.mubr.bf16.mxu0 %v864
        %1071 = vmatmul.mubr.bf16.gmra.mrb[0].mxu0 %v863
        %v1072 = vpop.f32.mrb[0].mxu0
        %v1073 = vadd.f32 %v908, %v1072
        %v1074 = vpop.f32.mrb[0].mxu0
        %v1075 = vpop.f32.mrb[0].mxu0
        %v1076 = vadd.f32 %v908, %v1075
        %v1077 = vpop.f32.mrb[0].mxu0
        %1078 = vmatprep.mubr.bf16.mxu0 %v866
        %1079 = vmatmul.mubr.bf16.gmra.mrb[0].mxu0 %v865
        %v1080 = vpop.f32.mrb[0].mxu0
        %v1081 = vadd.f32 %v908, %v1080
        %v1082 = vpop.f32.mrb[0].mxu0
        %v1083 = vpop.f32.mrb[0].mxu0
        %v1084 = vadd.f32 %v908, %v1083
        %v1085 = vpop.f32.mrb[0].mxu0
        %1086 = vmatprep.mubr.bf16.mxu0 %v868
        %1087 = vmatmul.mubr.bf16.gmra.mrb[0].mxu0 %v867
        %v1088 = vpop.f32.mrb[0].mxu0
        %v1089 = vadd.f32 %v908, %v1088
        %v1090 = vpop.f32.mrb[0].mxu0
        %v1091 = vpop.f32.mrb[0].mxu0
        %v1092 = vadd.f32 %v908, %v1091
        %v1093 = vpop.f32.mrb[0].mxu0
        %1094 = vmatprep.mubr.bf16.mxu0 %v870
        %1095 = vmatmul.mubr.bf16.gmra.mrb[0].mxu0 %v869
        %v1096 = vpop.f32.mrb[0].mxu0
        %v1097 = vadd.f32 %v908, %v1096
        %v1098 = vpop.f32.mrb[0].mxu0
        %v1099 = vpop.f32.mrb[0].mxu0
        %v1100 = vadd.f32 %v908, %v1099
        %v1101 = vpop.f32.mrb[0].mxu0
        %1102 = vdwg.mxu0
        %1103 = vst [vmem:[%s370] sm:$0xff] %v1041
        %1104 = vst [vmem:[%s370 + $0x8] sm:$0xff] %v1044
        %1105 = vst [vmem:[%s370 + $0x10] sm:$0xff] %v1049
        %1106 = vst [vmem:[%s370 + $0x18] sm:$0xff] %v1052
        %1107 = vst [vmem:[%s370 + $0x20] sm:$0xff] %v1057
        %1108 = vst [vmem:[%s370 + $0x28] sm:$0xff] %v1060
        %1109 = vst [vmem:[%s370 + $0x30] sm:$0xff] %v1065
        %1110 = vst [vmem:[%s370 + $0x38] sm:$0xff] %v1068
        %1111 = vst [vmem:[%s370 + $0x40] sm:$0xff] %v1073
        %1112 = vst [vmem:[%s370 + $0x48] sm:$0xff] %v1076
        %1113 = vst [vmem:[%s370 + $0x50] sm:$0xff] %v1081
        %1114 = vst [vmem:[%s370 + $0x58] sm:$0xff] %v1084
        %1115 = vst [vmem:[%s370 + $0x60] sm:$0xff] %v1089
        %1116 = vst [vmem:[%s370 + $0x68] sm:$0xff] %v1092
        %1117 = vst [vmem:[%s370 + $0x70] sm:$0xff] %v1097
        %1118 = vst [vmem:[%s370 + $0x78] sm:$0xff] %v1100
      $region52: #{directed_gnn_forward.3} parent=39 // pred_fallthru
        _
      %s1119 = smul.u32 16, %s22
      %p1120 = scmp.lt.s32.totalorder %s21, 1
      %s1121 = scalar_select %p1120, %s21, 1
      %p1122 = scmp.lt.s32.totalorder %s1119, 15
      %s1123 = scalar_select %p1122, %s1119, 15
      %s1124 = smul.addr %s1121, 16
      %s1125 = sadd.s32 %s1123, %s1124
      %s1126 = smul.addr %s1125, 8
      %s1127 = scalar_lea.vmem %s5, %s1126
      // Predicated region
      $region53: #{directed_gnn_forward.3} parent=39 // pred_check
        %p1128 = pneg %p191
      $region54: #{directed_gnn_forward.3} parent=39 // pred_check_branch
        %1130 = sbr.rel (%p1128) target = $region56
      $region55: #{directed_gnn_forward.3} parent=39 // pred_region
        %s1131 = smul.u32 16, %s22
      $region56: #{directed_gnn_forward.3} parent=39 // pred_fallthru
        _
    $region40: #{directed_gnn_forward.3} parent=5 // pred_fallthru
      _
    %p1132 = scmp.le.s32.totalorder 2, %s11
    // Predicated region
    $region57: #{directed_gnn_forward.3} parent=5 // pred_check
      %p1133 = pneg %p1132
    $region58: #{directed_gnn_forward.3} parent=5 // pred_check_branch
      %1135 = sbr.rel (%p1133) target = $region60
    $region59: #{directed_gnn_forward.3} parent=5 // pred_region
      %s1136 = ssub.s32 %s11, 2
      // Predicated region
      $region61: #{directed_gnn_forward.3} parent=59 // pred_check
        %p1137 = pneg %p197
      $region62: #{directed_gnn_forward.3} parent=59 // pred_check_branch
        %1139 = sbr.rel (%p1137) target = $region64
      $region63: #{directed_gnn_forward.3} parent=59 // pred_region
        %s1140 = smul.u32 16, %s25
        %p1141 = scmp.lt.s32.totalorder %s24, 1
        %s1142 = scalar_select %p1141, %s24, 1
        %p1143 = scmp.lt.s32.totalorder %s1140, 15
        %s1144 = scalar_select %p1143, %s1140, 15
        %s1145 = smul.addr %s1142, 16
        %s1146 = sadd.s32 %s1144, %s1145
        %s1147 = smul.addr %s1146, 8
        %s1148 = scalar_lea.vmem %s5, %s1147
      $region64: #{directed_gnn_forward.3} parent=59 // pred_fallthru
        _
    $region60: #{directed_gnn_forward.3} parent=5 // pred_fallthru
      _
  $region6: #{directed_gnn_forward.3} parent=0 // loop_footer
    %s15 = sadd.s32 1, %s11
  $region7: #{directed_gnn_forward.3} parent=0 // loop_footer_branch
    %10 = sbr.rel target = $region3
  $region8: #{directed_gnn_forward.3} parent=0 // loop_exit
    _

// kernel: directed_gnn_forward.2
$region0: #{directed_gnn_forward.2}
  #allocation0 [shape = 'u32[]', space=smem, size = 0x4, offset = 0x4, fixed_abs, tag = 'smem constant byte address 0x4 - core index']
  #allocation1 [shape = 'u32[144,128]{1,0:T(1,128)}', space=vmem, size = 0x12000, scoped, tag = 'internal scratch']
  #allocation2 [shape = 'f32[128,256]{1,0:T(8,128)}', space=vmem, size = 0x20000, scoped, tag = 'scratch operand']
  %s0 = inlined_call_operand.vmem [shape: s8[2,128,128], index: 0, kind: input, shape index: {}]
  %s1 = inlined_call_operand.vmem [shape: bf16[2,128,128], index: 1, kind: input, shape index: {}]
  %s2 = inlined_call_operand.vmem [shape: f32[2,128,1], index: 2, kind: input, shape index: {}]
  %s3 = inlined_call_operand.vmem [shape: bf16[2,256,128], index: 3, kind: input, shape index: {}]
  %s4 = inlined_call_operand.vmem [shape: f32[2,1,128], index: 4, kind: input, shape index: {}]
  %s5 = inlined_call_operand.vmem [shape: bf16[2,128,128], index: 5, kind: output, shape index: {}]
  %s6 = sld [smem:[#allocation0]]
  $region65: #{directed_gnn_forward.2} parent=0
    _
  %s8 = ssub.s32 1, %s6
  %s9 = scalar_select 0, %s8, %s6
  loop: start=0, step=1, limit=4
  $region2: #{directed_gnn_forward.2} parent=0 // loop_pre_header
    _
  $region3: #{directed_gnn_forward.2} parent=0 // loop_header
    %s11 = sphi 0, %s15
    %p12 = scmp.ge.s32.totalorder %s11, 4
    %s18 = sphi 0, %s37
    %s19 = sphi 0, %s33
    %s20 = sphi 0, %s29
    %s21 = sphi 0, %s18
    %s22 = sphi 0, %s19
    %s23 = sphi 0, %s20
    %s24 = sphi 0, %s21
    %s25 = sphi 0, %s22
    %s26 = sphi 0, %s23
    %s44 = sphi 0, %s46
    %s47 = sphi 0, %s44
    %s48 = sphi 0, %s47
    %s64 = sphi 0, %s48
    %s70 = sphi 0, %s72
    %s73 = sphi 0, %s70
    %s74 = sphi 0, %s73
    %s90 = sphi 0, %s74
    %s98 = sphi 0, %s100
    %s101 = sphi 0, %s98
    %s102 = sphi 0, %s101
    %s118 = sphi 0, %s102
    %s124 = sphi 0, %s126
    %s127 = sphi 0, %s124
    %s128 = sphi 0, %s127
    %s144 = sphi 0, %s128
    %s150 = sphi 0, %s152
    %s153 = sphi 0, %s150
    %s154 = sphi 0, %s153
    %s170 = sphi 0, %s154
    %s178 = sphi 0, %s180
    %s181 = sphi 0, %s178
    %s182 = sphi 0, %s181
    %s198 = sphi 0, %s182
  $region4: #{directed_gnn_forward.2} parent=0 // loop_header_branch
    %14 = sbr.rel (%p12) target = $region8
  $region5: #{directed_gnn_forward.2} parent=0 // loop_body
    %s16 = ssub.s32 %s11, 1
    %s17 = ssub.s32 %s11, 2
    %s27 = sadd.s32 1, %s20
    %p28 = scmp.ge.s32.totalorder %s27, 1
    %s29 = scalar_select %p28, 0, %s27
    %s30 = sadd.s32 1, %s19
    %s31 = scalar_select %p28, %s30, %s19
    %p32 = scmp.ge.s32.totalorder %s31, 1
    %s33 = scalar_select %p32, 0, %s31
    %s34 = sadd.s32 1, %s18
    %s35 = scalar_select %p32, %s34, %s18
    %p36 = scmp.ge.s32.totalorder %s35, 2
    %s37 = scalar_select %p36, 0, %s35
    %s38 = ssub.s32 %s18, %s37
    %s39 = ssub.s32 %s19, %s33
    %s40 = sor.u32 %s38, %s39
    %s41 = ssub.s32 %s20, %s29
    %s42 = sor.u32 %s40, %s41
    %p43 = scmp.eq.s32.totalorder %s42, 0
    %s45 = sadd.s32 %s44, 1
    %s46 = scalar_select %p43, %s44, %s45
    %p49 = pneg %p43
    %p50 = scmp.eq.s32.totalorder %s11, 1
    %p51 = por %p49, %p50
    %p52 = scmp.ne.s32.totalorder %s44, %s47
    %p53 = scmp.eq.s32.totalorder %s11, 0
    %p54 = por %p52, %p53
    %p55 = scmp.ne.s32.totalorder %s44, %s47
    %p56 = scmp.eq.s32.totalorder %s16, 1
    %p57 = por %p55, %p56
    %p58 = scmp.ne.s32.totalorder %s47, %s48
    %p59 = scmp.eq.s32.totalorder %s16, 0
    %p60 = por %p58, %p59
    %p61 = scmp.ne.s32.totalorder %s47, %s48
    %p62 = scmp.eq.s32.totalorder %s17, 1
    %p63 = por %p61, %p62
    %p65 = scmp.ne.s32.totalorder %s48, %s64
    %p66 = scmp.eq.s32.totalorder %s17, 0
    %p67 = por %p65, %p66
    %s68 = ssub.s32 %s18, %s37
    %p69 = scmp.eq.s32.totalorder %s68, 0
    %s71 = sadd.s32 %s70, 1
    %s72 = scalar_select %p69, %s70, %s71
    %p75 = pneg %p69
    %p76 = scmp.eq.s32.totalorder %s11, 1
    %p77 = por %p75, %p76
    %p78 = scmp.ne.s32.totalorder %s70, %s73
    %p79 = scmp.eq.s32.totalorder %s11, 0
    %p80 = por %p78, %p79
    %p81 = scmp.ne.s32.totalorder %s70, %s73
    %p82 = scmp.eq.s32.totalorder %s16, 1
    %p83 = por %p81, %p82
    %p84 = scmp.ne.s32.totalorder %s73, %s74
    %p85 = scmp.eq.s32.totalorder %s16, 0
    %p86 = por %p84, %p85
    %p87 = scmp.ne.s32.totalorder %s73, %s74
    %p88 = scmp.eq.s32.totalorder %s17, 1
    %p89 = por %p87, %p88
    %p91 = scmp.ne.s32.totalorder %s74, %s90
    %p92 = scmp.eq.s32.totalorder %s17, 0
    %p93 = por %p91, %p92
    %s94 = ssub.s32 %s18, %s37
    %s95 = ssub.s32 %s19, %s33
    %s96 = sor.u32 %s94, %s95
    %p97 = scmp.eq.s32.totalorder %s96, 0
    %s99 = sadd.s32 %s98, 1
    %s100 = scalar_select %p97, %s98, %s99
    %p103 = pneg %p97
    %p104 = scmp.eq.s32.totalorder %s11, 1
    %p105 = por %p103, %p104
    %p106 = scmp.ne.s32.totalorder %s98, %s101
    %p107 = scmp.eq.s32.totalorder %s11, 0
    %p108 = por %p106, %p107
    %p109 = scmp.ne.s32.totalorder %s98, %s101
    %p110 = scmp.eq.s32.totalorder %s16, 1
    %p111 = por %p109, %p110
    %p112 = scmp.ne.s32.totalorder %s101, %s102
    %p113 = scmp.eq.s32.totalorder %s16, 0
    %p114 = por %p112, %p113
    %p115 = scmp.ne.s32.totalorder %s101, %s102
    %p116 = scmp.eq.s32.totalorder %s17, 1
    %p117 = por %p115, %p116
    %p119 = scmp.ne.s32.totalorder %s102, %s118
    %p120 = scmp.eq.s32.totalorder %s17, 0
    %p121 = por %p119, %p120
    %s122 = ssub.s32 %s18, %s37
    %p123 = scmp.eq.s32.totalorder %s122, 0
    %s125 = sadd.s32 %s124, 1
    %s126 = scalar_select %p123, %s124, %s125
    %p129 = pneg %p123
    %p130 = scmp.eq.s32.totalorder %s11, 1
    %p131 = por %p129, %p130
    %p132 = scmp.ne.s32.totalorder %s124, %s127
    %p133 = scmp.eq.s32.totalorder %s11, 0
    %p134 = por %p132, %p133
    %p135 = scmp.ne.s32.totalorder %s124, %s127
    %p136 = scmp.eq.s32.totalorder %s16, 1
    %p137 = por %p135, %p136
    %p138 = scmp.ne.s32.totalorder %s127, %s128
    %p139 = scmp.eq.s32.totalorder %s16, 0
    %p140 = por %p138, %p139
    %p141 = scmp.ne.s32.totalorder %s127, %s128
    %p142 = scmp.eq.s32.totalorder %s17, 1
    %p143 = por %p141, %p142
    %p145 = scmp.ne.s32.totalorder %s128, %s144
    %p146 = scmp.eq.s32.totalorder %s17, 0
    %p147 = por %p145, %p146
    %s148 = ssub.s32 %s18, %s37
    %p149 = scmp.eq.s32.totalorder %s148, 0
    %s151 = sadd.s32 %s150, 1
    %s152 = scalar_select %p149, %s150, %s151
    %p155 = pneg %p149
    %p156 = scmp.eq.s32.totalorder %s11, 1
    %p157 = por %p155, %p156
    %p158 = scmp.ne.s32.totalorder %s150, %s153
    %p159 = scmp.eq.s32.totalorder %s11, 0
    %p160 = por %p158, %p159
    %p161 = scmp.ne.s32.totalorder %s150, %s153
    %p162 = scmp.eq.s32.totalorder %s16, 1
    %p163 = por %p161, %p162
    %p164 = scmp.ne.s32.totalorder %s153, %s154
    %p165 = scmp.eq.s32.totalorder %s16, 0
    %p166 = por %p164, %p165
    %p167 = scmp.ne.s32.totalorder %s153, %s154
    %p168 = scmp.eq.s32.totalorder %s17, 1
    %p169 = por %p167, %p168
    %p171 = scmp.ne.s32.totalorder %s154, %s170
    %p172 = scmp.eq.s32.totalorder %s17, 0
    %p173 = por %p171, %p172
    %s174 = ssub.s32 %s18, %s37
    %s175 = ssub.s32 %s19, %s33
    %s176 = sor.u32 %s174, %s175
    %p177 = scmp.eq.s32.totalorder %s176, 0
    %s179 = sadd.s32 %s178, 1
    %s180 = scalar_select %p177, %s178, %s179
    %p183 = pneg %p177
    %p184 = scmp.eq.s32.totalorder %s11, 1
    %p185 = por %p183, %p184
    %p186 = scmp.ne.s32.totalorder %s178, %s181
    %p187 = scmp.eq.s32.totalorder %s11, 0
    %p188 = por %p186, %p187
    %p189 = scmp.ne.s32.totalorder %s178, %s181
    %p190 = scmp.eq.s32.totalorder %s16, 1
    %p191 = por %p189, %p190
    %p192 = scmp.ne.s32.totalorder %s181, %s182
    %p193 = scmp.eq.s32.totalorder %s16, 0
    %p194 = por %p192, %p193
    %p195 = scmp.ne.s32.totalorder %s181, %s182
    %p196 = scmp.eq.s32.totalorder %s17, 1
    %p197 = por %p195, %p196
    %p199 = scmp.ne.s32.totalorder %s182, %s198
    %p200 = scmp.eq.s32.totalorder %s17, 0
    %p201 = por %p199, %p200
    %p202 = scmp.le.s32.totalorder 1, %s11
    %p203 = scmp.lt.s32.totalorder %s11, 3
    %p204 = pnand %p202, %p203
    %p205 = pneg %p204
    // Predicated region
    $region9: #{directed_gnn_forward.2} parent=5 // pred_check
      _
    $region10: #{directed_gnn_forward.2} parent=5 // pred_check_branch
      %207 = sbr.rel (%p204) target = $region12
    $region11: #{directed_gnn_forward.2} parent=5 // pred_region
      %s208 = ssub.s32 %s11, 1
    $region12: #{directed_gnn_forward.2} parent=5 // pred_fallthru
      _
    %p209 = scmp.lt.s32.totalorder %s11, 2
    // Predicated region
    $region13: #{directed_gnn_forward.2} parent=5 // pred_check
      %p210 = pneg %p209
    $region14: #{directed_gnn_forward.2} parent=5 // pred_check_branch
      %212 = sbr.rel (%p210) target = $region16
    $region15: #{directed_gnn_forward.2} parent=5 // pred_region
      // Predicated region
      $region17: #{directed_gnn_forward.2} parent=15 // pred_check
        %p213 = pneg %p54
      $region18: #{directed_gnn_forward.2} parent=15 // pred_check_branch
        %215 = sbr.rel (%p213) target = $region20
      $region19: #{directed_gnn_forward.2} parent=15 // pred_region
        %s216 = smul.u32 4, %s19
        %p217 = scmp.lt.s32.totalorder %s18, 1
        %s218 = scalar_select %p217, %s18, 1
        %p219 = scmp.lt.s32.totalorder %s216, 3
        %s220 = scalar_select %p219, %s216, 3
        %p221 = scmp.lt.s32.totalorder %s20, 0
        %s222 = scalar_select %p221, %s20, 0
        %s223 = sadd.s32 %s222, %s220
        %s224 = smul.addr %s218, 4
        %s225 = sadd.s32 %s223, %s224
        %s226 = smul.addr %s225, 8
        %s227 = scalar_lea.vmem %s0, %s226
        %s228 = smul.u32 4, %s19
      $region20: #{directed_gnn_forward.2} parent=15 // pred_fallthru
        _
      // Predicated region
      $region21: #{directed_gnn_forward.2} parent=15 // pred_check
        %p229 = pneg %p80
      $region22: #{directed_gnn_forward.2} parent=15 // pred_check_branch
        %231 = sbr.rel (%p229) target = $region24
      $region23: #{directed_gnn_forward.2} parent=15 // pred_region
        %p232 = scmp.lt.s32.totalorder %s18, 1
        %s233 = scalar_select %p232, %s18, 1
        %s234 = smul.addr %s233, 16
        %s235 = smul.addr %s234, 4
        %s236 = scalar_lea.vmem %s1, %s235
      $region24: #{directed_gnn_forward.2} parent=15 // pred_fallthru
        _
      // Predicated region
      $region25: #{directed_gnn_forward.2} parent=15 // pred_check
        %p237 = pneg %p108
      $region26: #{directed_gnn_forward.2} parent=15 // pred_check_branch
        %239 = sbr.rel (%p237) target = $region28
      $region27: #{directed_gnn_forward.2} parent=15 // pred_region
        %s240 = smul.u32 16, %s19
        %p241 = scmp.lt.s32.totalorder %s18, 1
        %s242 = scalar_select %p241, %s18, 1
        %p243 = scmp.lt.s32.totalorder %s240, 15
        %s244 = scalar_select %p243, %s240, 15
        %s245 = smul.addr %s242, 16
        %s246 = sadd.s32 %s244, %s245
        %s247 = smul.addr %s246, 8
        %s248 = scalar_lea.vmem %s2, %s247
        %s249 = smul.u32 16, %s19
      $region28: #{directed_gnn_forward.2} parent=15 // pred_fallthru
        _
      // Predicated region
      $region29: #{directed_gnn_forward.2} parent=15 // pred_check
        %p250 = pneg %p134
      $region30: #{directed_gnn_forward.2} parent=15 // pred_check_branch
        %252 = sbr.rel (%p250) target = $region32
      $region31: #{directed_gnn_forward.2} parent=15 // pred_region
        %p253 = scmp.lt.s32.totalorder %s18, 1
        %s254 = scalar_select %p253, %s18, 1
        %s255 = smul.addr %s254, 32
        %s256 = smul.addr %s255, 4
        %s257 = scalar_lea.vmem %s3, %s256
      $region32: #{directed_gnn_forward.2} parent=15 // pred_fallthru
        _
      // Predicated region
      $region33: #{directed_gnn_forward.2} parent=15 // pred_check
        %p258 = pneg %p160
      $region34: #{directed_gnn_forward.2} parent=15 // pred_check_branch
        %260 = sbr.rel (%p258) target = $region36
      $region35: #{directed_gnn_forward.2} parent=15 // pred_region
        %p261 = scmp.lt.s32.totalorder %s18, 1
        %s262 = scalar_select %p261, %s18, 1
        %s263 = scalar_lea.vmem %s4, %s262
      $region36: #{directed_gnn_forward.2} parent=15 // pred_fallthru
        _
    $region16: #{directed_gnn_forward.2} parent=5 // pred_fallthru
      _
    %p264 = scmp.le.s32.totalorder 1, %s11
    %p265 = scmp.lt.s32.totalorder %s11, 3
    %p266 = pnand %p264, %p265
    %p267 = pneg %p266
    // Predicated region
    $region37: #{directed_gnn_forward.2} parent=5 // pred_check
      _
    $region38: #{directed_gnn_forward.2} parent=5 // pred_check_branch
      %269 = sbr.rel (%p266) target = $region40
    $region39: #{directed_gnn_forward.2} parent=5 // pred_region
      %s270 = ssub.s32 %s11, 1
      %s271 = smul.u32 4, %s22
      %p272 = scmp.lt.s32.totalorder %s21, 1
      %s273 = scalar_select %p272, %s21, 1
      %p274 = scmp.lt.s32.totalorder %s271, 3
      %s275 = scalar_select %p274, %s271, 3
      %p276 = scmp.lt.s32.totalorder %s23, 0
      %s277 = scalar_select %p276, %s23, 0
      %s278 = sadd.s32 %s277, %s275
      %s279 = smul.addr %s273, 4
      %s280 = sadd.s32 %s278, %s279
      %s281 = smul.addr %s280, 8
      %s282 = scalar_lea.vmem %s0, %s281
      %p283 = pneg %p60
      %p284 = pneg %p57
      %p285 = scmp.lt.s32.totalorder %s21, 1
      %s286 = scalar_select %p285, %s21, 1
      %s287 = smul.addr %s286, 16
      %s288 = smul.addr %s287, 4
      %s289 = scalar_lea.vmem %s1, %s288
      %p290 = pneg %p86
      %p291 = pneg %p83
      %s292 = smul.u32 16, %s22
      %p293 = scmp.lt.s32.totalorder %s21, 1
      %s294 = scalar_select %p293, %s21, 1
      %p295 = scmp.lt.s32.totalorder %s292, 15
      %s296 = scalar_select %p295, %s292, 15
      %s297 = smul.addr %s294, 16
      %s298 = sadd.s32 %s296, %s297
      %s299 = smul.addr %s298, 8
      %s300 = scalar_lea.vmem %s2, %s299
      %p301 = pneg %p114
      %p302 = pneg %p111
      %p303 = scmp.lt.s32.totalorder %s21, 1
      %s304 = scalar_select %p303, %s21, 1
      %s305 = smul.addr %s304, 32
      %s306 = smul.addr %s305, 4
      %s307 = scalar_lea.vmem %s3, %s306
      %p308 = pneg %p140
      %p309 = pneg %p137
      %p310 = scmp.lt.s32.totalorder %s21, 1
      %s311 = scalar_select %p310, %s21, 1
      %s312 = scalar_lea.vmem %s4, %s311
      %p313 = pneg %p166
      %p314 = pneg %p163
      %p315 = pneg %p194
      %p316 = pneg %p191
      %s317 = smul.u32 16, %s22
      %p318 = scmp.lt.s32.totalorder %s21, 1
      %s319 = scalar_select %p318, %s21, 1
      %p320 = scmp.lt.s32.totalorder %s317, 15
      %s321 = scalar_select %p320, %s317, 15
      %s322 = smul.addr %s319, 16
      %s323 = sadd.s32 %s321, %s322
      %s324 = smul.addr %s323, 4
      %s325 = scalar_lea.vmem %s5, %s324
      %s326 = smul.u32 4, %s22
      %p327 = scmp.lt.s32.totalorder %s21, 1
      %s328 = scalar_select %p327, %s21, 1
      %p329 = scmp.lt.s32.totalorder %s326, 3
      %s330 = scalar_select %p329, %s326, 3
      %p331 = scmp.lt.s32.totalorder %s23, 0
      %s332 = scalar_select %p331, %s23, 0
      %s333 = sadd.s32 %s332, %s330
      %s334 = smul.addr %s328, 4
      %s335 = sadd.s32 %s333, %s334
      %s336 = smul.addr %s335, 8
      %s337 = scalar_lea.vmem %s0, %s336
      %s338 = smul.u32 4, %s22
      %p339 = scmp.lt.s32.totalorder %s21, 1
      %s340 = scalar_select %p339, %s21, 1
      %s341 = smul.addr %s340, 16
      %s342 = smul.addr %s341, 4
      %s343 = scalar_lea.vmem %s1, %s342
      %s344 = smul.u32 16, %s22
      %p345 = scmp.lt.s32.totalorder %s21, 1
      %s346 = scalar_select %p345, %s21, 1
      %p347 = scmp.lt.s32.totalorder %s344, 15
      %s348 = scalar_select %p347, %s344, 15
      %s349 = smul.addr %s346, 16
      %s350 = sadd.s32 %s348, %s349
      %s351 = smul.addr %s350, 8
      %s352 = scalar_lea.vmem %s2, %s351
      %s353 = smul.u32 16, %s22
      %p354 = scmp.lt.s32.totalorder %s21, 1
      %s355 = scalar_select %p354, %s21, 1
      %s356 = smul.addr %s355, 32
      %s357 = smul.addr %s356, 4
      %s358 = scalar_lea.vmem %s3, %s357
      %p359 = scmp.lt.s32.totalorder %s21, 1
      %s360 = scalar_select %p359, %s21, 1
      %s361 = scalar_lea.vmem %s4, %s360
      %s362 = smul.u32 16, %s22
      %p363 = scmp.lt.s32.totalorder %s21, 1
      %s364 = scalar_select %p363, %s21, 1
      %p365 = scmp.lt.s32.totalorder %s362, 15
      %s366 = scalar_select %p365, %s362, 15
      %s367 = smul.addr %s364, 16
      %s368 = sadd.s32 %s366, %s367
      %s369 = smul.addr %s368, 4
      %s370 = scalar_lea.vmem %s5, %s369
      %s371 = smul.u32 16, %s22
      %v373 = vld [vmem:[%s337] sm:$0xff]
      %v374 = vld [vmem:[%s337 + $0x8] sm:$0xff]
      %v375 = vld [vmem:[%s337 + $0x10] sm:$0xff]
      %v376 = vld [vmem:[%s337 + $0x18] sm:$0xff]
      %v377 = vunpack.c.l.s8.bf16 %v373
      %v378 = vunpack.c.h.s8.bf16 %v373
      %v379 = vunpack.c.l.s8.bf16 %v374
      %v380 = vunpack.c.h.s8.bf16 %v374
      %v381 = vunpack.c.l.s8.bf16 %v375
      %v382 = vunpack.c.h.s8.bf16 %v375
      %v383 = vunpack.c.l.s8.bf16 %v376
      %v384 = vunpack.c.h.s8.bf16 %v376
      %s385 = smul.u32 %s23, 128
      %s386 = sshra.s32 %s385, 3
      %s387 = sand.u32 %s385, 7
      %s388 = smul.addr %s386, 4
      %s389 = scalar_lea.vmem %s343, %s388
      %v390 = vld [vmem:[%s389] sm:$0xf]
      %v391 = vld [vmem:[%s389 + $0x4] sm:$0xf]
      %v392 = vld [vmem:[%s389 + $0x8] sm:$0xf]
      %v393 = vld [vmem:[%s389 + $0xc] sm:$0xf]
      %v394 = vld [vmem:[%s389 + $0x10] sm:$0xf]
      %v395 = vld [vmem:[%s389 + $0x14] sm:$0xf]
      %v396 = vld [vmem:[%s389 + $0x18] sm:$0xf]
      %v397 = vld [vmem:[%s389 + $0x1c] sm:$0xf]
      %v398 = vld [vmem:[%s389 + $0x20] sm:$0xf]
      %v399 = vld [vmem:[%s389 + $0x24] sm:$0xf]
      %v400 = vld [vmem:[%s389 + $0x28] sm:$0xf]
      %v401 = vld [vmem:[%s389 + $0x2c] sm:$0xf]
      %v402 = vld [vmem:[%s389 + $0x30] sm:$0xf]
      %v403 = vld [vmem:[%s389 + $0x34] sm:$0xf]
      %v404 = vld [vmem:[%s389 + $0x38] sm:$0xf]
      %v405 = vld [vmem:[%s389 + $0x3c] sm:$0xf]
      %v422 = vunpack.c.l.b16 %v390
      %v423 = vunpack.c.l.b16 %v391
      %v424 = vunpack.c.l.b16 %v392
      %v425 = vunpack.c.l.b16 %v393
      %v426 = vunpack.c.l.b16 %v394
      %v427 = vunpack.c.l.b16 %v395
      %v428 = vunpack.c.l.b16 %v396
      %v429 = vunpack.c.l.b16 %v397
      %v430 = vunpack.c.l.b16 %v398
      %v431 = vunpack.c.l.b16 %v399
      %v432 = vunpack.c.l.b16 %v400
      %v433 = vunpack.c.l.b16 %v401
      %v434 = vunpack.c.l.b16 %v402
      %v435 = vunpack.c.l.b16 %v403
      %v436 = vunpack.c.l.b16 %v404
      %v437 = vunpack.c.l.b16 %v405
      %v438 = vpack.c.b16 %v423, %v422
      %v439 = vpack.c.b16 %v425, %v424
      %v440 = vpack.c.b16 %v427, %v426
      %v441 = vpack.c.b16 %v429, %v428
      %v442 = vpack.c.b16 %v431, %v430
      %v443 = vpack.c.b16 %v433, %v432
      %v444 = vpack.c.b16 %v435, %v434
      %v445 = vpack.c.b16 %v437, %v436
      %454 = vmatprep.subr.bf16.mxu0 0
      %455 = vmatpush1.bf16.msra.mxu0 %v438
      %456 = vmatprep.subr.bf16.mxu0 0
      %457 = vmatpush1.bf16.msra.mxu0 %v439
      %458 = vmatprep.subr.bf16.mxu0 0
      %459 = vmatpush1.bf16.msra.mxu0 %v440
      %460 = vmatprep.subr.bf16.mxu0 0
      %461 = vmatpush1.bf16.msra.mxu0 %v441
      %462 = vmatprep.subr.bf16.mxu0 0
      %463 = vmatpush1.bf16.msra.mxu0 %v442
      %464 = vmatprep.subr.bf16.mxu0 0
      %465 = vmatpush1.bf16.msra.mxu0 %v443
      %466 = vmatprep.subr.bf16.mxu0 0
      %467 = vmatpush1.bf16.msra.mxu0 %v444
      %468 = vmatprep.subr.bf16.mxu0 0
      %469 = vmatpush1.bf16.msra.mxu0 %v445
      %470 = vmatprep.subr.bf16.mxu0 0
      %471 = vmatpush1.bf16.msra.mxu0 0
      %472 = vmatprep.subr.bf16.mxu0 0
      %473 = vmatpush1.bf16.msra.mxu0 0
      %474 = vmatprep.subr.bf16.mxu0 0
      %475 = vmatpush1.bf16.msra.mxu0 0
      %476 = vmatprep.subr.bf16.mxu0 0
      %477 = vmatpush1.bf16.msra.mxu0 0
      %478 = vmatprep.subr.bf16.mxu0 0
      %479 = vmatpush1.bf16.msra.mxu0 0
      %480 = vmatprep.subr.bf16.mxu0 0
      %481 = vmatpush1.bf16.msra.mxu0 0
      %482 = vmatprep.subr.bf16.mxu0 0
      %483 = vmatpush1.bf16.msra.mxu0 0
      %484 = vmatprep.subr.bf16.mxu0 0
      %485 = vmatpush1.bf16.msra.mxu0 0
      %486 = vmatprep.mubr.bf16.mxu0 0
      %487 = vmatmul.mubr.bf16.gmra.mrb[0].mxu0 %v377
      %v488 = vpop.f32.mrb[0].mxu0
      %v489 = vadd.f32 0.0, %v488
      %v490 = vpop.f32.mrb[0].mxu0
      %v491 = vpop.f32.mrb[0].mxu0
      %v492 = vadd.f32 0.0, %v491
      %v493 = vpop.f32.mrb[0].mxu0
      %494 = vmatprep.mubr.bf16.mxu0 0
      %495 = vmatmul.mubr.bf16.gmra.mrb[0].mxu0 %v378
      %v496 = vpop.f32.mrb[0].mxu0
      %v497 = vadd.f32 0.0, %v496
      %v498 = vpop.f32.mrb[0].mxu0
      %v499 = vpop.f32.mrb[0].mxu0
      %v500 = vadd.f32 0.0, %v499
      %v501 = vpop.f32.mrb[0].mxu0
      %502 = vmatprep.mubr.bf16.mxu0 0
      %503 = vmatmul.mubr.bf16.gmra.mrb[0].mxu0 %v379
      %v504 = vpop.f32.mrb[0].mxu0
      %v505 = vadd.f32 0.0, %v504
      %v506 = vpop.f32.mrb[0].mxu0
      %v507 = vpop.f32.mrb[0].mxu0
      %v508 = vadd.f32 0.0, %v507
      %v509 = vpop.f32.mrb[0].mxu0
      %510 = vmatprep.mubr.bf16.mxu0 0
      %511 = vmatmul.mubr.bf16.gmra.mrb[0].mxu0 %v380
      %v512 = vpop.f32.mrb[0].mxu0
      %v513 = vadd.f32 0.0, %v512
      %v514 = vpop.f32.mrb[0].mxu0
      %v515 = vpop.f32.mrb[0].mxu0
      %v516 = vadd.f32 0.0, %v515
      %v517 = vpop.f32.mrb[0].mxu0
      %518 = vmatprep.mubr.bf16.mxu0 0
      %519 = vmatmul.mubr.bf16.gmra.mrb[0].mxu0 %v381
      %v520 = vpop.f32.mrb[0].mxu0
      %v521 = vadd.f32 0.0, %v520
      %v522 = vpop.f32.mrb[0].mxu0
      %v523 = vpop.f32.mrb[0].mxu0
      %v524 = vadd.f32 0.0, %v523
      %v525 = vpop.f32.mrb[0].mxu0
      %526 = vmatprep.mubr.bf16.mxu0 0
      %527 = vmatmul.mubr.bf16.gmra.mrb[0].mxu0 %v382
      %v528 = vpop.f32.mrb[0].mxu0
      %v529 = vadd.f32 0.0, %v528
      %v530 = vpop.f32.mrb[0].mxu0
      %v531 = vpop.f32.mrb[0].mxu0
      %v532 = vadd.f32 0.0, %v531
      %v533 = vpop.f32.mrb[0].mxu0
      %534 = vmatprep.mubr.bf16.mxu0 0
      %535 = vmatmul.mubr.bf16.gmra.mrb[0].mxu0 %v383
      %v536 = vpop.f32.mrb[0].mxu0
      %v537 = vadd.f32 0.0, %v536
      %v538 = vpop.f32.mrb[0].mxu0
      %v539 = vpop.f32.mrb[0].mxu0
      %v540 = vadd.f32 0.0, %v539
      %v541 = vpop.f32.mrb[0].mxu0
      %542 = vmatprep.mubr.bf16.mxu0 0
      %543 = vmatmul.mubr.bf16.gmra.mrb[0].mxu0 %v384
      %v544 = vpop.f32.mrb[0].mxu0
      %v545 = vadd.f32 0.0, %v544
      %v546 = vpop.f32.mrb[0].mxu0
      %v547 = vpop.f32.mrb[0].mxu0
      %v548 = vadd.f32 0.0, %v547
      %v549 = vpop.f32.mrb[0].mxu0
      %550 = vdwg.mxu0
      %p551 = scmp.eq.s32.totalorder %s23, 0
      // Predicated region
      $region41: #{directed_gnn_forward.2} parent=39 // pred_check
        %p552 = pneg %p551
      $region42: #{directed_gnn_forward.2} parent=39 // pred_check_branch
        %554 = sbr.rel (%p552) target = $region44
      $region43: #{directed_gnn_forward.2} parent=39 // pred_region
        %s555 = smul.u32 %s22, 128
        %556 = vst [vmem:[#allocation2] sm:$0xff] %v489
        %557 = vst [vmem:[#allocation2 + $0x10] sm:$0xff] %v492
        %558 = vst [vmem:[#allocation2 + $0x20] sm:$0xff] %v497
        %559 = vst [vmem:[#allocation2 + $0x30] sm:$0xff] %v500
        %560 = vst [vmem:[#allocation2 + $0x40] sm:$0xff] %v505
        %561 = vst [vmem:[#allocation2 + $0x50] sm:$0xff] %v508
        %562 = vst [vmem:[#allocation2 + $0x60] sm:$0xff] %v513
        %563 = vst [vmem:[#allocation2 + $0x70] sm:$0xff] %v516
        %564 = vst [vmem:[#allocation2 + $0x80] sm:$0xff] %v521
        %565 = vst [vmem:[#allocation2 + $0x90] sm:$0xff] %v524
        %566 = vst [vmem:[#allocation2 + $0xa0] sm:$0xff] %v529
        %567 = vst [vmem:[#allocation2 + $0xb0] sm:$0xff] %v532
        %568 = vst [vmem:[#allocation2 + $0xc0] sm:$0xff] %v537
        %569 = vst [vmem:[#allocation2 + $0xd0] sm:$0xff] %v540
        %570 = vst [vmem:[#allocation2 + $0xe0] sm:$0xff] %v545
        %571 = vst [vmem:[#allocation2 + $0xf0] sm:$0xff] %v548
        %s572 = sshra.s32 %s555, 3
        %s573 = sand.u32 %s555, 7
        %s574 = smul.addr %s572, 4
        %s575 = scalar_lea.vmem %s343, %s574
        %v576 = vld [vmem:[%s575] sm:$0xf]
        %v577 = vld [vmem:[%s575 + $0x4] sm:$0xf]
        %v578 = vld [vmem:[%s575 + $0x8] sm:$0xf]
        %v579 = vld [vmem:[%s575 + $0xc] sm:$0xf]
        %v580 = vld [vmem:[%s575 + $0x10] sm:$0xf]
        %v581 = vld [vmem:[%s575 + $0x14] sm:$0xf]
        %v582 = vld [vmem:[%s575 + $0x18] sm:$0xf]
        %v583 = vld [vmem:[%s575 + $0x1c] sm:$0xf]
        %v584 = vld [vmem:[%s575 + $0x20] sm:$0xf]
        %v585 = vld [vmem:[%s575 + $0x24] sm:$0xf]
        %v586 = vld [vmem:[%s575 + $0x28] sm:$0xf]
        %v587 = vld [vmem:[%s575 + $0x2c] sm:$0xf]
        %v588 = vld [vmem:[%s575 + $0x30] sm:$0xf]
        %v589 = vld [vmem:[%s575 + $0x34] sm:$0xf]
        %v590 = vld [vmem:[%s575 + $0x38] sm:$0xf]
        %v591 = vld [vmem:[%s575 + $0x3c] sm:$0xf]
        %v592 = vunpack.c.l.bf16 %v576
        %v593 = vunpack.c.l.bf16 %v577
        %v594 = vunpack.c.l.bf16 %v578
        %v595 = vunpack.c.l.bf16 %v579
        %v596 = vunpack.c.l.bf16 %v580
        %v597 = vunpack.c.l.bf16 %v581
        %v598 = vunpack.c.l.bf16 %v582
        %v599 = vunpack.c.l.bf16 %v583
        %v600 = vunpack.c.l.bf16 %v584
        %v601 = vunpack.c.l.bf16 %v585
        %v602 = vunpack.c.l.bf16 %v586
        %v603 = vunpack.c.l.bf16 %v587
        %v604 = vunpack.c.l.bf16 %v588
        %v605 = vunpack.c.l.bf16 %v589
        %v606 = vunpack.c.l.bf16 %v590
        %v607 = vunpack.c.l.bf16 %v591
        %608 = vst [vmem:[#allocation2 + $0x8] sm:$0xff] %v592
        %609 = vst [vmem:[#allocation2 + $0x18] sm:$0xff] %v593
        %610 = vst [vmem:[#allocation2 + $0x28] sm:$0xff] %v594
        %611 = vst [vmem:[#allocation2 + $0x38] sm:$0xff] %v595
        %612 = vst [vmem:[#allocation2 + $0x48] sm:$0xff] %v596
        %613 = vst [vmem:[#allocation2 + $0x58] sm:$0xff] %v597
        %614 = vst [vmem:[#allocation2 + $0x68] sm:$0xff] %v598
        %615 = vst [vmem:[#allocation2 + $0x78] sm:$0xff] %v599
        %616 = vst [vmem:[#allocation2 + $0x88] sm:$0xff] %v600
        %617 = vst [vmem:[#allocation2 + $0x98] sm:$0xff] %v601
        %618 = vst [vmem:[#allocation2 + $0xa8] sm:$0xff] %v602
        %619 = vst [vmem:[#allocation2 + $0xb8] sm:$0xff] %v603
        %620 = vst [vmem:[#allocation2 + $0xc8] sm:$0xff] %v604
        %621 = vst [vmem:[#allocation2 + $0xd8] sm:$0xff] %v605
        %622 = vst [vmem:[#allocation2 + $0xe8] sm:$0xff] %v606
        %623 = vst [vmem:[#allocation2 + $0xf8] sm:$0xff] %v607
      $region44: #{directed_gnn_forward.2} parent=39 // pred_fallthru
        _
      %p624 = scmp.gt.s32.totalorder %s23, 0
      // Predicated region
      $region45: #{directed_gnn_forward.2} parent=39 // pred_check
        %p625 = pneg %p624
      $region46: #{directed_gnn_forward.2} parent=39 // pred_check_branch
        %627 = sbr.rel (%p625) target = $region48
      $region47: #{directed_gnn_forward.2} parent=39 // pred_region
        %v628 = vld [vmem:[#allocation2] sm:$0xff]
        %v629 = vld [vmem:[#allocation2 + $0x10] sm:$0xff]
        %v630 = vld [vmem:[#allocation2 + $0x20] sm:$0xff]
        %v631 = vld [vmem:[#allocation2 + $0x30] sm:$0xff]
        %v632 = vld [vmem:[#allocation2 + $0x40] sm:$0xff]
        %v633 = vld [vmem:[#allocation2 + $0x50] sm:$0xff]
        %v634 = vld [vmem:[#allocation2 + $0x60] sm:$0xff]
        %v635 = vld [vmem:[#allocation2 + $0x70] sm:$0xff]
        %v636 = vld [vmem:[#allocation2 + $0x80] sm:$0xff]
        %v637 = vld [vmem:[#allocation2 + $0x90] sm:$0xff]
        %v638 = vld [vmem:[#allocation2 + $0xa0] sm:$0xff]
        %v639 = vld [vmem:[#allocation2 + $0xb0] sm:$0xff]
        %v640 = vld [vmem:[#allocation2 + $0xc0] sm:$0xff]
        %v641 = vld [vmem:[#allocation2 + $0xd0] sm:$0xff]
        %v642 = vld [vmem:[#allocation2 + $0xe0] sm:$0xff]
        %v643 = vld [vmem:[#allocation2 + $0xf0] sm:$0xff]
        %v644 = vadd.f32 %v628, %v489
        %v645 = vadd.f32 %v629, %v492
        %v646 = vadd.f32 %v630, %v497
        %v647 = vadd.f32 %v631, %v500
        %v648 = vadd.f32 %v632, %v505
        %v649 = vadd.f32 %v633, %v508
        %v650 = vadd.f32 %v634, %v513
        %v651 = vadd.f32 %v635, %v516
        %v652 = vadd.f32 %v636, %v521
        %v653 = vadd.f32 %v637, %v524
        %v654 = vadd.f32 %v638, %v529
        %v655 = vadd.f32 %v639, %v532
        %v656 = vadd.f32 %v640, %v537
        %v657 = vadd.f32 %v641, %v540
        %v658 = vadd.f32 %v642, %v545
        %v659 = vadd.f32 %v643, %v548
        %660 = vst [vmem:[#allocation2] sm:$0xff] %v644
        %661 = vst [vmem:[#allocation2 + $0x10] sm:$0xff] %v645
        %662 = vst [vmem:[#allocation2 + $0x20] sm:$0xff] %v646
        %663 = vst [vmem:[#allocation2 + $0x30] sm:$0xff] %v647
        %664 = vst [vmem:[#allocation2 + $0x40] sm:$0xff] %v648
        %665 = vst [vmem:[#allocation2 + $0x50] sm:$0xff] %v649
        %666 = vst [vmem:[#allocation2 + $0x60] sm:$0xff] %v650
        %667 = vst [vmem:[#allocation2 + $0x70] sm:$0xff] %v651
        %668 = vst [vmem:[#allocation2 + $0x80] sm:$0xff] %v652
        %669 = vst [vmem:[#allocation2 + $0x90] sm:$0xff] %v653
        %670 = vst [vmem:[#allocation2 + $0xa0] sm:$0xff] %v654
        %671 = vst [vmem:[#allocation2 + $0xb0] sm:$0xff] %v655
        %672 = vst [vmem:[#allocation2 + $0xc0] sm:$0xff] %v656
        %673 = vst [vmem:[#allocation2 + $0xd0] sm:$0xff] %v657
        %674 = vst [vmem:[#allocation2 + $0xe0] sm:$0xff] %v658
        %675 = vst [vmem:[#allocation2 + $0xf0] sm:$0xff] %v659
      $region48: #{directed_gnn_forward.2} parent=39 // pred_fallthru
        _
      // Predicated region
      $region49: #{directed_gnn_forward.2} parent=39 // pred_check
        %p676 = pneg %p551
      $region50: #{directed_gnn_forward.2} parent=39 // pred_check_branch
        %678 = sbr.rel (%p676) target = $region52
      $region51: #{directed_gnn_forward.2} parent=39 // pred_region
        %v679 = vld [vmem:[#allocation2] sm:$0xff]
        %v680 = vld [vmem:[#allocation2 + $0x10] sm:$0xff]
        %v681 = vld [vmem:[#allocation2 + $0x20] sm:$0xff]
        %v682 = vld [vmem:[#allocation2 + $0x30] sm:$0xff]
        %v683 = vld [vmem:[#allocation2 + $0x40] sm:$0xff]
        %v684 = vld [vmem:[#allocation2 + $0x50] sm:$0xff]
        %v685 = vld [vmem:[#allocation2 + $0x60] sm:$0xff]
        %v686 = vld [vmem:[#allocation2 + $0x70] sm:$0xff]
        %v687 = vld [vmem:[#allocation2 + $0x80] sm:$0xff]
        %v688 = vld [vmem:[#allocation2 + $0x90] sm:$0xff]
        %v689 = vld [vmem:[#allocation2 + $0xa0] sm:$0xff]
        %v690 = vld [vmem:[#allocation2 + $0xb0] sm:$0xff]
        %v691 = vld [vmem:[#allocation2 + $0xc0] sm:$0xff]
        %v692 = vld [vmem:[#allocation2 + $0xd0] sm:$0xff]
        %v693 = vld [vmem:[#allocation2 + $0xe0] sm:$0xff]
        %v694 = vld [vmem:[#allocation2 + $0xf0] sm:$0xff]
        %v695 = vld [vmem:[%s352] sm:$0xff]
        %v696 = vld [vmem:[%s352 + $0x8] sm:$0xff]
        %v697 = vld [vmem:[%s352 + $0x10] sm:$0xff]
        %v698 = vld [vmem:[%s352 + $0x18] sm:$0xff]
        %v699 = vld [vmem:[%s352 + $0x20] sm:$0xff]
        %v700 = vld [vmem:[%s352 + $0x28] sm:$0xff]
        %v701 = vld [vmem:[%s352 + $0x30] sm:$0xff]
        %v702 = vld [vmem:[%s352 + $0x38] sm:$0xff]
        %v703 = vld [vmem:[%s352 + $0x40] sm:$0xff]
        %v704 = vld [vmem:[%s352 + $0x48] sm:$0xff]
        %v705 = vld [vmem:[%s352 + $0x50] sm:$0xff]
        %v706 = vld [vmem:[%s352 + $0x58] sm:$0xff]
        %v707 = vld [vmem:[%s352 + $0x60] sm:$0xff]
        %v708 = vld [vmem:[%s352 + $0x68] sm:$0xff]
        %v709 = vld [vmem:[%s352 + $0x70] sm:$0xff]
        %v710 = vld [vmem:[%s352 + $0x78] sm:$0xff]
        %712 = vset.pattern.permute.xlu0 0
        %713 = vperm.xlu0 %712, %v695
        %v714 = vpop.permute.xlu0 %713
        %717 = vset.pattern.permute.xlu0 0
        %718 = vperm.xlu0 %717, %v696
        %v719 = vpop.permute.xlu0 %718
        %722 = vset.pattern.permute.xlu0 0
        %723 = vperm.xlu0 %722, %v697
        %v724 = vpop.permute.xlu0 %723
        %727 = vset.pattern.permute.xlu0 0
        %728 = vperm.xlu0 %727, %v698
        %v729 = vpop.permute.xlu0 %728
        %732 = vset.pattern.permute.xlu0 0
        %733 = vperm.xlu0 %732, %v699
        %v734 = vpop.permute.xlu0 %733
        %737 = vset.pattern.permute.xlu0 0
        %738 = vperm.xlu0 %737, %v700
        %v739 = vpop.permute.xlu0 %738
        %742 = vset.pattern.permute.xlu0 0
        %743 = vperm.xlu0 %742, %v701
        %v744 = vpop.permute.xlu0 %743
        %747 = vset.pattern.permute.xlu0 0
        %748 = vperm.xlu0 %747, %v702
        %v749 = vpop.permute.xlu0 %748
        %752 = vset.pattern.permute.xlu0 0
        %753 = vperm.xlu0 %752, %v703
        %v754 = vpop.permute.xlu0 %753
        %757 = vset.pattern.permute.xlu0 0
        %758 = vperm.xlu0 %757, %v704
        %v759 = vpop.permute.xlu0 %758
        %762 = vset.pattern.permute.xlu0 0
        %763 = vperm.xlu0 %762, %v705
        %v764 = vpop.permute.xlu0 %763
        %767 = vset.pattern.permute.xlu0 0
        %768 = vperm.xlu0 %767, %v706
        %v769 = vpop.permute.xlu0 %768
        %772 = vset.pattern.permute.xlu0 0
        %773 = vperm.xlu0 %772, %v707
        %v774 = vpop.permute.xlu0 %773
        %777 = vset.pattern.permute.xlu0 0
        %778 = vperm.xlu0 %777, %v708
        %v779 = vpop.permute.xlu0 %778
        %782 = vset.pattern.permute.xlu0 0
        %783 = vperm.xlu0 %782, %v709
        %v784 = vpop.permute.xlu0 %783
        %787 = vset.pattern.permute.xlu0 0
        %788 = vperm.xlu0 %787, %v710
        %v789 = vpop.permute.xlu0 %788
        %v791 = vmul.f32 %v679, %v714
        %v792 = vmul.f32 %v680, %v719
        %v793 = vmul.f32 %v681, %v724
        %v794 = vmul.f32 %v682, %v729
        %v795 = vmul.f32 %v683, %v734
        %v796 = vmul.f32 %v684, %v739
        %v797 = vmul.f32 %v685, %v744
        %v798 = vmul.f32 %v686, %v749
        %v799 = vmul.f32 %v687, %v754
        %v800 = vmul.f32 %v688, %v759
        %v801 = vmul.f32 %v689, %v764
        %v802 = vmul.f32 %v690, %v769
        %v803 = vmul.f32 %v691, %v774
        %v804 = vmul.f32 %v692, %v779
        %v805 = vmul.f32 %v693, %v784
        %v806 = vmul.f32 %v694, %v789
        %807 = vst [vmem:[#allocation2] sm:$0xff] %v791
        %808 = vst [vmem:[#allocation2 + $0x10] sm:$0xff] %v792
        %809 = vst [vmem:[#allocation2 + $0x20] sm:$0xff] %v793
        %810 = vst [vmem:[#allocation2 + $0x30] sm:$0xff] %v794
        %811 = vst [vmem:[#allocation2 + $0x40] sm:$0xff] %v795
        %812 = vst [vmem:[#allocation2 + $0x50] sm:$0xff] %v796
        %813 = vst [vmem:[#allocation2 + $0x60] sm:$0xff] %v797
        %814 = vst [vmem:[#allocation2 + $0x70] sm:$0xff] %v798
        %815 = vst [vmem:[#allocation2 + $0x80] sm:$0xff] %v799
        %816 = vst [vmem:[#allocation2 + $0x90] sm:$0xff] %v800
        %817 = vst [vmem:[#allocation2 + $0xa0] sm:$0xff] %v801
        %818 = vst [vmem:[#allocation2 + $0xb0] sm:$0xff] %v802
        %819 = vst [vmem:[#allocation2 + $0xc0] sm:$0xff] %v803
        %820 = vst [vmem:[#allocation2 + $0xd0] sm:$0xff] %v804
        %821 = vst [vmem:[#allocation2 + $0xe0] sm:$0xff] %v805
        %822 = vst [vmem:[#allocation2 + $0xf0] sm:$0xff] %v806
        %v823 = vld [vmem:[#allocation2] sm:$0xff]
        %v824 = vld [vmem:[#allocation2 + $0x8] sm:$0xff]
        %v825 = vld [vmem:[#allocation2 + $0x10] sm:$0xff]
        %v826 = vld [vmem:[#allocation2 + $0x18] sm:$0xff]
        %v827 = vld [vmem:[#allocation2 + $0x20] sm:$0xff]
        %v828 = vld [vmem:[#allocation2 + $0x28] sm:$0xff]
        %v829 = vld [vmem:[#allocation2 + $0x30] sm:$0xff]
        %v830 = vld [vmem:[#allocation2 + $0x38] sm:$0xff]
        %v831 = vld [vmem:[#allocation2 + $0x40] sm:$0xff]
        %v832 = vld [vmem:[#allocation2 + $0x48] sm:$0xff]
        %v833 = vld [vmem:[#allocation2 + $0x50] sm:$0xff]
        %v834 = vld [vmem:[#allocation2 + $0x58] sm:$0xff]
        %v835 = vld [vmem:[#allocation2 + $0x60] sm:$0xff]
        %v836 = vld [vmem:[#allocation2 + $0x68] sm:$0xff]
        %v837 = vld [vmem:[#allocation2 + $0x70] sm:$0xff]
        %v838 = vld [vmem:[#allocation2 + $0x78] sm:$0xff]
        %v839 = vld [vmem:[#allocation2 + $0x80] sm:$0xff]
        %v840 = vld [vmem:[#allocation2 + $0x88] sm:$0xff]
        %v841 = vld [vmem:[#allocation2 + $0x90] sm:$0xff]
        %v842 = vld [vmem:[#allocation2 + $0x98] sm:$0xff]
        %v843 = vld [vmem:[#allocation2 + $0xa0] sm:$0xff]
        %v844 = vld [vmem:[#allocation2 + $0xa8] sm:$0xff]
        %v845 = vld [vmem:[#allocation2 + $0xb0] sm:$0xff]
        %v846 = vld [vmem:[#allocation2 + $0xb8] sm:$0xff]
        %v847 = vld [vmem:[#allocation2 + $0xc0] sm:$0xff]
        %v848 = vld [vmem:[#allocation2 + $0xc8] sm:$0xff]
        %v849 = vld [vmem:[#allocation2 + $0xd0] sm:$0xff]
        %v850 = vld [vmem:[#allocation2 + $0xd8] sm:$0xff]
        %v851 = vld [vmem:[#allocation2 + $0xe0] sm:$0xff]
        %v852 = vld [vmem:[#allocation2 + $0xe8] sm:$0xff]
        %v853 = vld [vmem:[#allocation2 + $0xf0] sm:$0xff]
        %v854 = vld [vmem:[#allocation2 + $0xf8] sm:$0xff]
        %v855 = vpack.c.bf16 %v825, %v823
        %v856 = vpack.c.bf16 %v826, %v824
        %v857 = vpack.c.bf16 %v829, %v827
        %v858 = vpack.c.bf16 %v830, %v828
        %v859 = vpack.c.bf16 %v833, %v831
        %v860 = vpack.c.bf16 %v834, %v832
        %v861 = vpack.c.bf16 %v837, %v835
        %v862 = vpack.c.bf16 %v838, %v836
        %v863 = vpack.c.bf16 %v841, %v839
        %v864 = vpack.c.bf16 %v842, %v840
        %v865 = vpack.c.bf16 %v845, %v843
        %v866 = vpack.c.bf16 %v846, %v844
        %v867 = vpack.c.bf16 %v849, %v847
        %v868 = vpack.c.bf16 %v850, %v848
        %v869 = vpack.c.bf16 %v853, %v851
        %v870 = vpack.c.bf16 %v854, %v852
        %v871 = vld [vmem:[%s358] sm:$0xf]
        %v872 = vld [vmem:[%s358 + $0x4] sm:$0xf]
        %v873 = vld [vmem:[%s358 + $0x8] sm:$0xf]
        %v874 = vld [vmem:[%s358 + $0xc] sm:$0xf]
        %v875 = vld [vmem:[%s358 + $0x10] sm:$0xf]
        %v876 = vld [vmem:[%s358 + $0x14] sm:$0xf]
        %v877 = vld [vmem:[%s358 + $0x18] sm:$0xf]
        %v878 = vld [vmem:[%s358 + $0x1c] sm:$0xf]
        %v879 = vld [vmem:[%s358 + $0x20] sm:$0xf]
        %v880 = vld [vmem:[%s358 + $0x24] sm:$0xf]
        %v881 = vld [vmem:[%s358 + $0x28] sm:$0xf]
        %v882 = vld [vmem:[%s358 + $0x2c] sm:$0xf]
        %v883 = vld [vmem:[%s358 + $0x30] sm:$0xf]
        %v884 = vld [vmem:[%s358 + $0x34] sm:$0xf]
        %v885 = vld [vmem:[%s358 + $0x38] sm:$0xf]
        %v886 = vld [vmem:[%s358 + $0x3c] sm:$0xf]
        %v887 = vld [vmem:[%s358 + $0x40] sm:$0xf]
        %v888 = vld [vmem:[%s358 + $0x44] sm:$0xf]
        %v889 = vld [vmem:[%s358 + $0x48] sm:$0xf]
        %v890 = vld [vmem:[%s358 + $0x4c] sm:$0xf]
        %v891 = vld [vmem:[%s358 + $0x50] sm:$0xf]
        %v892 = vld [vmem:[%s358 + $0x54] sm:$0xf]
        %v893 = vld [vmem:[%s358 + $0x58] sm:$0xf]
        %v894 = vld [vmem:[%s358 + $0x5c] sm:$0xf]
        %v895 = vld [vmem:[%s358 + $0x60] sm:$0xf]
        %v896 = vld [vmem:[%s358 + $0x64] sm:$0xf]
        %v897 = vld [vmem:[%s358 + $0x68] sm:$0xf]
        %v898 = vld [vmem:[%s358 + $0x6c] sm:$0xf]
        %v899 = vld [vmem:[%s358 + $0x70] sm:$0xf]
        %v900 = vld [vmem:[%s358 + $0x74] sm:$0xf]
        %v901 = vld [vmem:[%s358 + $0x78] sm:$0xf]
        %v902 = vld [vmem:[%s358 + $0x7c] sm:$0xf]
        %v903 = vld [vmem:[%s361] sm:$0x1]
        %v905 = vlaneseq
        %v906 = vshrl.u32 %v905, 7
        %v907 = vsub.s32 0, %v906
        %v908 = vrot.slane %v903, %v907
        %v942 = vunpack.c.l.b16 %v871
        %v943 = vunpack.c.l.b16 %v872
        %v944 = vunpack.c.l.b16 %v873
        %v945 = vunpack.c.l.b16 %v874
        %v946 = vunpack.c.l.b16 %v875
        %v947 = vunpack.c.l.b16 %v876
        %v948 = vunpack.c.l.b16 %v877
        %v949 = vunpack.c.l.b16 %v878
        %v950 = vunpack.c.l.b16 %v879
        %v951 = vunpack.c.l.b16 %v880
        %v952 = vunpack.c.l.b16 %v881
        %v953 = vunpack.c.l.b16 %v882
        %v954 = vunpack.c.l.b16 %v883
        %v955 = vunpack.c.l.b16 %v884
        %v956 = vunpack.c.l.b16 %v885
        %v957 = vunpack.c.l.b16 %v886
        %v958 = vunpack.c.l.b16 %v887
        %v959 = vunpack.c.l.b16 %v888
        %v960 = vunpack.c.l.b16 %v889
        %v961 = vunpack.c.l.b16 %v890
        %v962 = vunpack.c.l.b16 %v891
        %v963 = vunpack.c.l.b16 %v892
        %v964 = vunpack.c.l.b16 %v893
        %v965 = vunpack.c.l.b16 %v894
        %v966 = vunpack.c.l.b16 %v895
        %v967 = vunpack.c.l.b16 %v896
        %v968 = vunpack.c.l.b16 %v897
        %v969 = vunpack.c.l.b16 %v898
        %v970 = vunpack.c.l.b16 %v899
        %v971 = vunpack.c.l.b16 %v900
        %v972 = vunpack.c.l.b16 %v901
        %v973 = vunpack.c.l.b16 %v902
        %v974 = vpack.c.b16 %v943, %v942
        %v975 = vpack.c.b16 %v945, %v944
        %v976 = vpack.c.b16 %v947, %v946
        %v977 = vpack.c.b16 %v949, %v948
        %v978 = vpack.c.b16 %v951, %v950
        %v979 = vpack.c.b16 %v953, %v952
        %v980 = vpack.c.b16 %v955, %v954
        %v981 = vpack.c.b16 %v957, %v956
        %v982 = vpack.c.b16 %v959, %v958
        %v983 = vpack.c.b16 %v961, %v960
        %v984 = vpack.c.b16 %v963, %v962
        %v985 = vpack.c.b16 %v965, %v964
        %v986 = vpack.c.b16 %v967, %v966
        %v987 = vpack.c.b16 %v969, %v968
        %v988 = vpack.c.b16 %v971, %v970
        %v989 = vpack.c.b16 %v973, %v972
        %1006 = vmatprep.subr.bf16.mxu0 0
        %1007 = vmatpush1.bf16.msra.mxu0 %v974
        %1008 = vmatprep.subr.bf16.mxu0 0
        %1009 = vmatpush1.bf16.msra.mxu0 %v975
        %1010 = vmatprep.subr.bf16.mxu0 0
        %1011 = vmatpush1.bf16.msra.mxu0 %v976
        %1012 = vmatprep.subr.bf16.mxu0 0
        %1013 = vmatpush1.bf16.msra.mxu0 %v977
        %1014 = vmatprep.subr.bf16.mxu0 0
        %1015 = vmatpush1.bf16.msra.mxu0 %v978
        %1016 = vmatprep.subr.bf16.mxu0 0
        %1017 = vmatpush1.bf16.msra.mxu0 %v979
        %1018 = vmatprep.subr.bf16.mxu0 0
        %1019 = vmatpush1.bf16.msra.mxu0 %v980
        %1020 = vmatprep.subr.bf16.mxu0 0
        %1021 = vmatpush1.bf16.msra.mxu0 %v981
        %1022 = vmatprep.subr.bf16.mxu0 0
        %1023 = vmatpush1.bf16.msra.mxu0 %v982
        %1024 = vmatprep.subr.bf16.mxu0 0
        %1025 = vmatpush1.bf16.msra.mxu0 %v983
        %1026 = vmatprep.subr.bf16.mxu0 0
        %1027 = vmatpush1.bf16.msra.mxu0 %v984
        %1028 = vmatprep.subr.bf16.mxu0 0
        %1029 = vmatpush1.bf16.msra.mxu0 %v985
        %1030 = vmatprep.subr.bf16.mxu0 0
        %1031 = vmatpush1.bf16.msra.mxu0 %v986
        %1032 = vmatprep.subr.bf16.mxu0 0
        %1033 = vmatpush1.bf16.msra.mxu0 %v987
        %1034 = vmatprep.subr.bf16.mxu0 0
        %1035 = vmatpush1.bf16.msra.mxu0 %v988
        %1036 = vmatprep.subr.bf16.mxu0 0
        %1037 = vmatpush1.bf16.msra.mxu0 %v989
        %1038 = vmatprep.mubr.bf16.mxu0 %v856
        %1039 = vmatmul.mubr.bf16.gmra.mrb[0].mxu0 %v855
        %v1040 = vpop.f32.mrb[0].mxu0
        %v1041 = vadd.f32 %v908, %v1040
        %v1042 = vpop.f32.mrb[0].mxu0
        %v1043 = vpop.f32.mrb[0].mxu0
        %v1044 = vadd.f32 %v908, %v1043
        %v1045 = vpop.f32.mrb[0].mxu0
        %1046 = vmatprep.mubr.bf16.mxu0 %v858
        %1047 = vmatmul.mubr.bf16.gmra.mrb[0].mxu0 %v857
        %v1048 = vpop.f32.mrb[0].mxu0
        %v1049 = vadd.f32 %v908, %v1048
        %v1050 = vpop.f32.mrb[0].mxu0
        %v1051 = vpop.f32.mrb[0].mxu0
        %v1052 = vadd.f32 %v908, %v1051
        %v1053 = vpop.f32.mrb[0].mxu0
        %1054 = vmatprep.mubr.bf16.mxu0 %v860
        %1055 = vmatmul.mubr.bf16.gmra.mrb[0].mxu0 %v859
        %v1056 = vpop.f32.mrb[0].mxu0
        %v1057 = vadd.f32 %v908, %v1056
        %v1058 = vpop.f32.mrb[0].mxu0
        %v1059 = vpop.f32.mrb[0].mxu0
        %v1060 = vadd.f32 %v908, %v1059
        %v1061 = vpop.f32.mrb[0].mxu0
        %1062 = vmatprep.mubr.bf16.mxu0 %v862
        %1063 = vmatmul.mubr.bf16.gmra.mrb[0].mxu0 %v861
        %v1064 = vpop.f32.mrb[0].mxu0
        %v1065 = vadd.f32 %v908, %v1064
        %v1066 = vpop.f32.mrb[0].mxu0
        %v1067 = vpop.f32.mrb[0].mxu0
        %v1068 = vadd.f32 %v908, %v1067
        %v1069 = vpop.f32.mrb[0].mxu0
        %1070 = vmatprep.mubr.bf16.mxu0 %v864
        %1071 = vmatmul.mubr.bf16.gmra.mrb[0].mxu0 %v863
        %v1072 = vpop.f32.mrb[0].mxu0
        %v1073 = vadd.f32 %v908, %v1072
        %v1074 = vpop.f32.mrb[0].mxu0
        %v1075 = vpop.f32.mrb[0].mxu0
        %v1076 = vadd.f32 %v908, %v1075
        %v1077 = vpop.f32.mrb[0].mxu0
        %1078 = vmatprep.mubr.bf16.mxu0 %v866
        %1079 = vmatmul.mubr.bf16.gmra.mrb[0].mxu0 %v865
        %v1080 = vpop.f32.mrb[0].mxu0
        %v1081 = vadd.f32 %v908, %v1080
        %v1082 = vpop.f32.mrb[0].mxu0
        %v1083 = vpop.f32.mrb[0].mxu0
        %v1084 = vadd.f32 %v908, %v1083
        %v1085 = vpop.f32.mrb[0].mxu0
        %1086 = vmatprep.mubr.bf16.mxu0 %v868
        %1087 = vmatmul.mubr.bf16.gmra.mrb[0].mxu0 %v867
        %v1088 = vpop.f32.mrb[0].mxu0
        %v1089 = vadd.f32 %v908, %v1088
        %v1090 = vpop.f32.mrb[0].mxu0
        %v1091 = vpop.f32.mrb[0].mxu0
        %v1092 = vadd.f32 %v908, %v1091
        %v1093 = vpop.f32.mrb[0].mxu0
        %1094 = vmatprep.mubr.bf16.mxu0 %v870
        %1095 = vmatmul.mubr.bf16.gmra.mrb[0].mxu0 %v869
        %v1096 = vpop.f32.mrb[0].mxu0
        %v1097 = vadd.f32 %v908, %v1096
        %v1098 = vpop.f32.mrb[0].mxu0
        %v1099 = vpop.f32.mrb[0].mxu0
        %v1100 = vadd.f32 %v908, %v1099
        %v1101 = vpop.f32.mrb[0].mxu0
        %1102 = vdwg.mxu0
        %v1103 = vmax.f32 %v1041, 0.0
        %v1104 = vmax.f32 %v1044, 0.0
        %v1105 = vmax.f32 %v1049, 0.0
        %v1106 = vmax.f32 %v1052, 0.0
        %v1107 = vmax.f32 %v1057, 0.0
        %v1108 = vmax.f32 %v1060, 0.0
        %v1109 = vmax.f32 %v1065, 0.0
        %v1110 = vmax.f32 %v1068, 0.0
        %v1111 = vmax.f32 %v1073, 0.0
        %v1112 = vmax.f32 %v1076, 0.0
        %v1113 = vmax.f32 %v1081, 0.0
        %v1114 = vmax.f32 %v1084, 0.0
        %v1115 = vmax.f32 %v1089, 0.0
        %v1116 = vmax.f32 %v1092, 0.0
        %v1117 = vmax.f32 %v1097, 0.0
        %v1118 = vmax.f32 %v1100, 0.0
        %v1119 = vpack.c.bf16 %v1104, %v1103
        %v1120 = vpack.c.bf16 %v1106, %v1105
        %v1121 = vpack.c.bf16 %v1108, %v1107
        %v1122 = vpack.c.bf16 %v1110, %v1109
        %v1123 = vpack.c.bf16 %v1112, %v1111
        %v1124 = vpack.c.bf16 %v1114, %v1113
        %v1125 = vpack.c.bf16 %v1116, %v1115
        %v1126 = vpack.c.bf16 %v1118, %v1117
        %v1135 = vunpack.c.l.b16 %v1119
        %v1136 = vunpack.c.h.b16 %v1119
        %v1137 = vunpack.c.l.b16 %v1120
        %v1138 = vunpack.c.h.b16 %v1120
        %v1139 = vunpack.c.l.b16 %v1121
        %v1140 = vunpack.c.h.b16 %v1121
        %v1141 = vunpack.c.l.b16 %v1122
        %v1142 = vunpack.c.h.b16 %v1122
        %v1143 = vunpack.c.l.b16 %v1123
        %v1144 = vunpack.c.h.b16 %v1123
        %v1145 = vunpack.c.l.b16 %v1124
        %v1146 = vunpack.c.h.b16 %v1124
        %v1147 = vunpack.c.l.b16 %v1125
        %v1148 = vunpack.c.h.b16 %v1125
        %v1149 = vunpack.c.l.b16 %v1126
        %v1150 = vunpack.c.h.b16 %v1126
        %v1151 = vpack.c.b16 %v1135, %v1135
        %v1152 = vpack.c.b16 %v1136, %v1136
        %v1153 = vpack.c.b16 %v1137, %v1137
        %v1154 = vpack.c.b16 %v1138, %v1138
        %v1155 = vpack.c.b16 %v1139, %v1139
        %v1156 = vpack.c.b16 %v1140, %v1140
        %v1157 = vpack.c.b16 %v1141, %v1141
        %v1158 = vpack.c.b16 %v1142, %v1142
        %v1159 = vpack.c.b16 %v1143, %v1143
        %v1160 = vpack.c.b16 %v1144, %v1144
        %v1161 = vpack.c.b16 %v1145, %v1145
        %v1162 = vpack.c.b16 %v1146, %v1146
        %v1163 = vpack.c.b16 %v1147, %v1147
        %v1164 = vpack.c.b16 %v1148, %v1148
        %v1165 = vpack.c.b16 %v1149, %v1149
        %v1166 = vpack.c.b16 %v1150, %v1150
        %1183 = vst [vmem:[%s370] sm:$0xf] %v1151
        %1184 = vst [vmem:[%s370 + $0x4] sm:$0xf] %v1152
        %1185 = vst [vmem:[%s370 + $0x8] sm:$0xf] %v1153
        %1186 = vst [vmem:[%s370 + $0xc] sm:$0xf] %v1154
        %1187 = vst [vmem:[%s370 + $0x10] sm:$0xf] %v1155
        %1188 = vst [vmem:[%s370 + $0x14] sm:$0xf] %v1156
        %1189 = vst [vmem:[%s370 + $0x18] sm:$0xf] %v1157
        %1190 = vst [vmem:[%s370 + $0x1c] sm:$0xf] %v1158
        %1191 = vst [vmem:[%s370 + $0x20] sm:$0xf] %v1159
        %1192 = vst [vmem:[%s370 + $0x24] sm:$0xf] %v1160
        %1193 = vst [vmem:[%s370 + $0x28] sm:$0xf] %v1161
        %1194 = vst [vmem:[%s370 + $0x2c] sm:$0xf] %v1162
        %1195 = vst [vmem:[%s370 + $0x30] sm:$0xf] %v1163
        %1196 = vst [vmem:[%s370 + $0x34] sm:$0xf] %v1164
        %1197 = vst [vmem:[%s370 + $0x38] sm:$0xf] %v1165
        %1198 = vst [vmem:[%s370 + $0x3c] sm:$0xf] %v1166
      $region52: #{directed_gnn_forward.2} parent=39 // pred_fallthru
        _
      %s1199 = smul.u32 16, %s22
      %p1200 = scmp.lt.s32.totalorder %s21, 1
      %s1201 = scalar_select %p1200, %s21, 1
      %p1202 = scmp.lt.s32.totalorder %s1199, 15
      %s1203 = scalar_select %p1202, %s1199, 15
      %s1204 = smul.addr %s1201, 16
      %s1205 = sadd.s32 %s1203, %s1204
      %s1206 = smul.addr %s1205, 4
      %s1207 = scalar_lea.vmem %s5, %s1206
      // Predicated region
      $region53: #{directed_gnn_forward.2} parent=39 // pred_check
        %p1208 = pneg %p191
      $region54: #{directed_gnn_forward.2} parent=39 // pred_check_branch
        %1210 = sbr.rel (%p1208) target = $region56
      $region55: #{directed_gnn_forward.2} parent=39 // pred_region
        %s1211 = smul.u32 16, %s22
      $region56: #{directed_gnn_forward.2} parent=39 // pred_fallthru
        _
    $region40: #{directed_gnn_forward.2} parent=5 // pred_fallthru
      _
    %p1212 = scmp.le.s32.totalorder 2, %s11
    // Predicated region
    $region57: #{directed_gnn_forward.2} parent=5 // pred_check
      %p1213 = pneg %p1212
    $region58: #{directed_gnn_forward.2} parent=5 // pred_check_branch
      %1215 = sbr.rel (%p1213) target = $region60
    $region59: #{directed_gnn_forward.2} parent=5 // pred_region
      %s1216 = ssub.s32 %s11, 2
      // Predicated region
      $region61: #{directed_gnn_forward.2} parent=59 // pred_check
        %p1217 = pneg %p197
      $region62: #{directed_gnn_forward.2} parent=59 // pred_check_branch
        %1219 = sbr.rel (%p1217) target = $region64
      $region63: #{directed_gnn_forward.2} parent=59 // pred_region
        %s1220 = smul.u32 16, %s25
        %p1221 = scmp.lt.s32.totalorder %s24, 1
        %s1222 = scalar_select %p1221, %s24, 1
        %p1223 = scmp.lt.s32.totalorder %s1220, 15
        %s1224 = scalar_select %p1223, %s1220, 15
        %s1225 = smul.addr %s1222, 16
        %s1226 = sadd.s32 %s1224, %s1225
        %s1227 = smul.addr %s1226, 4
        %s1228 = scalar_lea.vmem %s5, %s1227
      $region64: #{directed_gnn_forward.2} parent=59 // pred_fallthru
        _
    $region60: #{directed_gnn_forward.2} parent=5 // pred_fallthru
      _
  $region6: #{directed_gnn_forward.2} parent=0 // loop_footer
    %s15 = sadd.s32 1, %s11
  $region7: #{directed_gnn_forward.2} parent=0 // loop_footer_branch
    %10 = sbr.rel target = $region3
  $region8: #{directed_gnn_forward.2} parent=0 // loop_exit
    _

</llo_original>
